<compile_context>
chip_gen: v5e
topology: v5e:2x2
jax: 0.10.0
libtpu: 0.0.40
codegen_flags: <defaults>
</compile_context>

<pallas_src>
import functools

import jax
import jax.numpy as jnp
from jax import lax
from jax.experimental import pallas as pl
from jax.experimental.pallas import tpu as pltpu


# --------------------------------------------------------------------------------------
# Helpers
# --------------------------------------------------------------------------------------
def _gelu_tanh(x):
    c = 0.7978845608028654  # sqrt(2/pi)
    return 0.5 * x * (1.0 + jnp.tanh(c * (x + 0.044715 * x * x * x)))


def _row_tile(m, tile_m):
    """Row tile that divides work into >=2 grid steps when possible (v7x has 2 TCs)."""
    tm = min(tile_m, m)
    if tm == m and m % 16 == 0:
        tm = m // 2
    return tm


# --------------------------------------------------------------------------------------
# Kernel 1: fused Q/K/V projection  (x @ [Wq|Wk|Wv] + [bq|bk|bv], three lane-dense outputs)
# --------------------------------------------------------------------------------------
def _qkv_kernel(x_ref, w_ref, b_ref, q_ref, k_ref, v_ref, *, hid_dim, compute_dtype):
    x = x_ref[...].astype(compute_dtype)                      # (tm, H)
    y = jnp.dot(x, w_ref[...], preferred_element_type=jnp.float32) + b_ref[...]
    q_ref[...] = y[:, :hid_dim].astype(q_ref.dtype)
    k_ref[...] = y[:, hid_dim:2 * hid_dim].astype(k_ref.dtype)
    v_ref[...] = y[:, 2 * hid_dim:].astype(v_ref.dtype)


def qkv_proj(x, w_qkv, b_qkv, *, compute_dtype, tile_m=128):
    M, K = x.shape
    N3 = w_qkv.shape[1]
    H = N3 // 3
    tm = _row_tile(M, tile_m)
    out = jax.ShapeDtypeStruct((M, H), x.dtype)
    return pl.pallas_call(
        functools.partial(_qkv_kernel, hid_dim=H, compute_dtype=compute_dtype),
        out_shape=(out, out, out),
        grid_spec=pltpu.PrefetchScalarGridSpec(
            num_scalar_prefetch=0,
            grid=(pl.cdiv(M, tm),),
            in_specs=[
                pl.BlockSpec((tm, K), lambda i: (i, 0)),
                pl.BlockSpec((K, N3), lambda i: (0, 0)),     # VMEM-resident fused weight
                pl.BlockSpec((1, N3), lambda i: (0, 0)),
            ],
            out_specs=(
                pl.BlockSpec((tm, H), lambda i: (i, 0)),
                pl.BlockSpec((tm, H), lambda i: (i, 0)),
                pl.BlockSpec((tm, H), lambda i: (i, 0)),
            ),
        ),
        compiler_params=pltpu.CompilerParams(dimension_semantics=("parallel",)),
    )(x, w_qkv, b_qkv)


# --------------------------------------------------------------------------------------
# Kernel 2: per-batch attention (all heads in one step, heads sliced by lane offset).
#   Standard heads 0..NH-2, bias head NH-1 applies Q1 @ weight; only the last head's
#   pre-softmax energy (== biaW) is emitted.
# --------------------------------------------------------------------------------------
def _attention_kernel(q_ref, k_ref, v_ref, hw_ref, o_ref, e_ref, *,
                      n_heads, head_dim, inv_scale):
    qb = q_ref[...]                                           # (S, H) f32
    kb = k_ref[...]
    vb = v_ref[...]
    outs = []
    for h in range(n_heads):                                  # NH is small -> unrolled
        lo = h * head_dim
        hi = lo + head_dim
        q = qb[:, lo:hi]
        k = kb[:, lo:hi]
        v = vb[:, lo:hi]
        if h == n_heads - 1:
            # Last head: per-batch random "bias weight" transform (Q1 @ weight).
            q = jnp.dot(q, hw_ref[0], preferred_element_type=jnp.float32)
        energy = lax.dot_general(
            q, k, (((1,), (1,)), ((), ())), preferred_element_type=jnp.float32
        ) * inv_scale                                         # (S, S) f32
        if h == n_heads - 1:
            e_ref[0, 0] = energy                              # biaW == energy1 (f32)
        m = jnp.max(energy, axis=-1, keepdims=True)
        p = jnp.exp(energy - m)
        attn = p * pl.reciprocal(jnp.sum(p, axis=-1, keepdims=True), approx=True)
        outs.append(jnp.dot(attn, v, preferred_element_type=jnp.float32))
    # Single lane-dense (S, H) store in concat-heads order (matches torch's cat + view).
    o_ref[...] = jnp.concatenate(outs, axis=-1).astype(o_ref.dtype)


def attention(q2d, k2d, v2d, head_w, *, batch, seq_len, n_heads, inv_scale):
    M, H = q2d.shape
    head_dim = H // n_heads
    B, S = batch, seq_len
    qkv_spec = pl.BlockSpec((S, H), lambda b: (b, 0))
    return pl.pallas_call(
        functools.partial(_attention_kernel, n_heads=n_heads, head_dim=head_dim,
                          inv_scale=inv_scale),
        out_shape=(
            jax.ShapeDtypeStruct((M, H), q2d.dtype),          # ctx in (B*S, H) layout
            jax.ShapeDtypeStruct((B, 1, S, S), jnp.float32),  # last-head energy only
        ),
        grid_spec=pltpu.PrefetchScalarGridSpec(
            num_scalar_prefetch=0,
            grid=(B,),
            in_specs=[qkv_spec, qkv_spec, qkv_spec,
                      pl.BlockSpec((1, head_dim, head_dim), lambda b: (b, 0, 0))],
            out_specs=(
                pl.BlockSpec((S, H), lambda b: (b, 0)),
                pl.BlockSpec((1, 1, S, S), lambda b: (b, 0, 0, 0)),
            ),
        ),
        compiler_params=pltpu.CompilerParams(
            dimension_semantics=("parallel",),
            vmem_limit_bytes=48 * 1024 * 1024,                # explicit budget (v7x: < 64 MiB)
        ),
    )(q2d, k2d, v2d, head_w)


# --------------------------------------------------------------------------------------
# Kernel 3: Linear + residual add + LayerNorm epilogue  (used for fc_o -> +src -> LN1)
# --------------------------------------------------------------------------------------
def _linear_add_ln_kernel(x_ref, w_ref, b_ref, r_ref, g_ref, bt_ref, o_ref, *,
                          eps, compute_dtype):
    x = x_ref[...].astype(compute_dtype)
    y = jnp.dot(x, w_ref[...], preferred_element_type=jnp.float32) + b_ref[...]
    z = y + r_ref[...]                                        # residual add in f32
    mu = jnp.mean(z, axis=-1, keepdims=True)                  # LN stats in f32
    zc = z - mu
    var = jnp.mean(zc * zc, axis=-1, keepdims=True)
    o_ref[...] = (zc * lax.rsqrt(var + eps) * g_ref[...] + bt_ref[...]).astype(o_ref.dtype)


def linear_add_ln(x, w, b, resid, gamma, beta, *, compute_dtype, eps=1e-5, tile_m=128):
    M, K = x.shape
    N = w.shape[1]
    tm = _row_tile(M, tile_m)
    return pl.pallas_call(
        functools.partial(_linear_add_ln_kernel, eps=eps, compute_dtype=compute_dtype),
        out_shape=jax.ShapeDtypeStruct((M, N), x.dtype),
        grid_spec=pltpu.PrefetchScalarGridSpec(
            num_scalar_prefetch=0,
            grid=(pl.cdiv(M, tm),),
            in_specs=[
                pl.BlockSpec((tm, K), lambda i: (i, 0)),
                pl.BlockSpec((K, N), lambda i: (0, 0)),
                pl.BlockSpec((1, N), lambda i: (0, 0)),
                pl.BlockSpec((tm, N), lambda i: (i, 0)),
                pl.BlockSpec((1, N), lambda i: (0, 0)),
                pl.BlockSpec((1, N), lambda i: (0, 0)),
            ],
            out_specs=pl.BlockSpec((tm, N), lambda i: (i, 0)),
        ),
        compiler_params=pltpu.CompilerParams(dimension_semantics=("parallel",)),
    )(x, w, b.reshape(1, N), resid, gamma.reshape(1, N), beta.reshape(1, N))


# --------------------------------------------------------------------------------------
# Kernel 4: fused MLP (FF1 -> GELU -> FF2) + residual add + LayerNorm2.
#   The (tm, PF) hidden activation never leaves VMEM; w1/w2 are VMEM-resident.
# --------------------------------------------------------------------------------------
def _mlp_add_ln_kernel(x_ref, w1_ref, b1_ref, w2_ref, b2_ref, g_ref, bt_ref, o_ref, *,
                       eps, compute_dtype):
    x = x_ref[...]                                            # (tm, H) f32; also the residual
    h = jnp.dot(x.astype(compute_dtype), w1_ref[...],
                preferred_element_type=jnp.float32) + b1_ref[...]
    h = _gelu_tanh(h)
    f = jnp.dot(h.astype(compute_dtype), w2_ref[...],
                preferred_element_type=jnp.float32) + b2_ref[...]
    z = x + f
    mu = jnp.mean(z, axis=-1, keepdims=True)
    zc = z - mu
    var = jnp.mean(zc * zc, axis=-1, keepdims=True)
    o_ref[...] = (zc * lax.rsqrt(var + eps) * g_ref[...] + bt_ref[...]).astype(o_ref.dtype)


def mlp_add_ln(x, w1, b1, w2, b2, gamma, beta, *, compute_dtype, eps=1e-5, tile_m=128):
    M, H = x.shape
    PF = w1.shape[1]
    tm = _row_tile(M, tile_m)
    return pl.pallas_call(
        functools.partial(_mlp_add_ln_kernel, eps=eps, compute_dtype=compute_dtype),
        out_shape=jax.ShapeDtypeStruct((M, H), x.dtype),
        grid_spec=pltpu.PrefetchScalarGridSpec(
            num_scalar_prefetch=0,
            grid=(pl.cdiv(M, tm),),
            in_specs=[
                pl.BlockSpec((tm, H), lambda i: (i, 0)),
                pl.BlockSpec((H, PF), lambda i: (0, 0)),      # VMEM-resident weights
                pl.BlockSpec((1, PF), lambda i: (0, 0)),
                pl.BlockSpec((PF, H), lambda i: (0, 0)),
                pl.BlockSpec((1, H), lambda i: (0, 0)),
                pl.BlockSpec((1, H), lambda i: (0, 0)),
                pl.BlockSpec((1, H), lambda i: (0, 0)),
            ],
            out_specs=pl.BlockSpec((tm, H), lambda i: (i, 0)),
        ),
        compiler_params=pltpu.CompilerParams(
            dimension_semantics=("parallel",),
            vmem_limit_bytes=48 * 1024 * 1024,
        ),
    )(x, w1, b1.reshape(1, PF), w2, b2.reshape(1, H),
      gamma.reshape(1, H), beta.reshape(1, H))


# --------------------------------------------------------------------------------------
# EncoderLayer forward (Pallas-backed): 4 fused kernels, no XLA transposes in between.
# --------------------------------------------------------------------------------------
def encoder_layer_forward(src, params, head_weight, *, n_heads,
                          compute_dtype=jnp.bfloat16, eps=1e-5, tile_m=128):
    B, S, H = src.shape
    hd = H // n_heads
    M = B * S
    cd = compute_dtype
    x2d = src.reshape(M, H)

    # Fused QKV projection (matmul operands in compute_dtype, f32 accumulation/outputs).
    w_qkv = jnp.concatenate([params["wq"], params["wk"], params["wv"]], axis=1).astype(cd)
    b_qkv = jnp.concatenate([params["bq"], params["bk"], params["bv"]]).reshape(1, 3 * H)
    q2d, k2d, v2d = qkv_proj(x2d, w_qkv, b_qkv, compute_dtype=cd, tile_m=tile_m)

    # Attention: heads indexed by lane offset inside the kernel; ctx comes out in
    # (B*S, H) concat-heads layout; biaW is only the last head's energy.
    ctx2d, biaW = attention(q2d, k2d, v2d, head_weight.reshape(B, hd, hd),
                            batch=B, seq_len=S, n_heads=n_heads,
                            inv_scale=1.0 / (float(hd) ** 0.5))

    # Output projection fused with residual add + LayerNorm 1 (dropout == identity).
    src1 = linear_add_ln(ctx2d, params["wo"].astype(cd), params["bo"], x2d,
                         params["ln1_g"], params["ln1_b"],
                         compute_dtype=cd, eps=eps, tile_m=tile_m)

    # Fused MLP + residual add + LayerNorm 2.
    out2d = mlp_add_ln(src1, params["w1"].astype(cd), params["b1"],
                       params["w2"].astype(cd), params["b2"],
                       params["ln2_g"], params["ln2_b"],
                       compute_dtype=cd, eps=eps, tile_m=tile_m)

    return out2d.reshape(B, S, H), biaW


# --------------------------------------------------------------------------------------
# Pure-JAX f32 reference (same math, same tanh GELU) for correctness checks.
# --------------------------------------------------------------------------------------
def reference_forward(src, params, head_weight, *, n_heads, eps=1e-5):
    B, S, H = src.shape
    hd = H // n_heads

    def lin(x, w, b):
        return jnp.dot(x, w, preferred_element_type=jnp.float32) + b

    def ln(y, g, b):
        mu = y.mean(-1, keepdims=True)
        yc = y - mu
        var = (yc * yc).mean(-1, keepdims=True)
        return yc / jnp.sqrt(var + eps) * g + b

    x2d = src.reshape(B * S, H)
    q = lin(x2d, params["wq"], params["bq"]).reshape(B, S, n_heads, hd).transpose(0, 2, 1, 3)
    k = lin(x2d, params["wk"], params["bk"]).reshape(B, S, n_heads, hd).transpose(0, 2, 1, 3)
    v = lin(x2d, params["wv"], params["bv"]).reshape(B, S, n_heads, hd).transpose(0, 2, 1, 3)

    q0, q1 = q[:, :-1], q[:, -1:]
    k0, k1 = k[:, :-1], k[:, -1:]
    v0, v1 = v[:, :-1], v[:, -1:]
    scale = float(hd) ** 0.5

    e0 = jnp.einsum("bhqd,bhkd->bhqk", q0, k0) / scale
    x0 = jnp.einsum("bhqk,bhkd->bhqd", jax.nn.softmax(e0, axis=-1), v0)

    q1w = jnp.einsum("bhqd,bhde->bhqe", q1, head_weight)
    e1 = jnp.einsum("bhqd,bhkd->bhqk", q1w, k1) / scale
    x1 = jnp.einsum("bhqk,bhkd->bhqd", jax.nn.softmax(e1, axis=-1), v1)

    xcat = jnp.concatenate([x0, x1], axis=1).transpose(0, 2, 1, 3).reshape(B * S, H)
    ao = lin(xcat, params["wo"], params["bo"])
    s1 = ln(x2d + ao, params["ln1_g"], params["ln1_b"])
    h = _gelu_tanh(lin(s1, params["w1"], params["b1"]))
    f = lin(h, params["w2"], params["b2"])
    out = ln(s1 + f, params["ln2_g"], params["ln2_b"])
    return out.reshape(B, S, H), e1


# --------------------------------------------------------------------------------------
if __name__ == "__main__":
    key = jax.random.PRNGKey(0)
    # Small, TPU-aligned shapes consistent with the module (hid_dim % n_heads == 0,
    # pf_dim == 4 * hid_dim, as in the spec).
    B, S, H, NH = 2, 128, 256, 4
    PF = 4 * H
    hd = H // NH
    f32 = jnp.float32
    ks = jax.random.split(key, 16)

    def rnd(k, shape, scale=0.03):
        return (scale * jax.random.normal(k, shape)).astype(f32)

    params = {
        "wq": rnd(ks[0], (H, H)), "bq": rnd(ks[1], (H,), 0.01),
        "wk": rnd(ks[2], (H, H)), "bk": rnd(ks[3], (H,), 0.01),
        "wv": rnd(ks[4], (H, H)), "bv": rnd(ks[5], (H,), 0.01),
        "wo": rnd(ks[6], (H, H)), "bo": rnd(ks[7], (H,), 0.01),
        "ln1_g": jnp.ones((H,), f32), "ln1_b": jnp.zeros((H,), f32),
        "w1": rnd(ks[8], (H, PF)), "b1": rnd(ks[9], (PF,), 0.01),
        "w2": rnd(ks[10], (PF, H)), "b2": rnd(ks[11], (H,), 0.01),
        "ln2_g": jnp.ones((H,), f32), "ln2_b": jnp.zeros((H,), f32),
    }
    src = jax.random.normal(ks[12], (B, S, H), f32)
    # Forward-time random "bias weight" applied to the last head (torch.randn in the spec).
    head_weight = jax.random.normal(ks[13], (B, 1, hd, hd), f32)

    fwd = jax.jit(encoder_layer_forward, static_argnames=("n_heads", "compute_dtype"))
    ref = jax.jit(reference_forward, static_argnames=("n_heads",))

    ref_out, ref_bia = jax.block_until_ready(ref(src, params, head_weight, n_heads=NH))

    # --- f32 run: tight numerical check (addresses the "1e-1 is too loose" review note) ---
    out, biaW = jax.block_until_ready(
        fwd(src, params, head_weight, n_heads=NH, compute_dtype=jnp.float32))
    assert out.shape == (B, S, H), out.shape
    assert biaW.shape == (B, 1, S, S), biaW.shape
    err_o = float(jnp.max(jnp.abs(out - ref_out)))
    err_b = float(jnp.max(jnp.abs(biaW - ref_bia)))
    assert err_o < 5e-3, f"f32 output mismatch: max abs err {err_o}"
    assert err_b < 1e-3, f"f32 energy (biaW) mismatch: max abs err {err_b}"

    # --- bf16-operand run (v6e/v7x fast path): f32 accumulation, f32 energy & LN stats ---
    out16, bia16 = jax.block_until_ready(
        fwd(src, params, head_weight, n_heads=NH, compute_dtype=jnp.bfloat16))
    err_o16 = float(jnp.max(jnp.abs(out16 - ref_out)))
    err_b16 = float(jnp.max(jnp.abs(bia16 - ref_bia)))
    assert err_o16 < 5e-2, f"bf16 output mismatch: max abs err {err_o16}"
    assert err_b16 < 5e-2, f"bf16 energy (biaW) mismatch: max abs err {err_b16}"

    print("KERNEL_OK")
</pallas_src>

<mosaic_0001>
module {
  func.func @main(%arg0: i32, %arg1: i32, %arg2: i32, %arg3: i32, %arg4: memref<1x1x128x128xf32, #tpu.memory_space<vmem>>, %arg5: memref<1x1x128x64xf32, #tpu.memory_space<vmem>>, %arg6: memref<1x1x128x64xf32, #tpu.memory_space<vmem>>, %arg7: memref<1x1x128x1xf32, #tpu.memory_space<vmem>>, %arg8: memref<1x1x128x1xf32, #tpu.memory_space<vmem>>) attributes {dimension_semantics = [#tpu.dimension_semantics<parallel>, #tpu.dimension_semantics<parallel>, #tpu.dimension_semantics<parallel>, #tpu.dimension_semantics<arbitrary>], iteration_bounds = array<i64: 2, 3, 1, 1>, scratch_operands = 2 : i64, window_params = [{transform_indices = @qk_fn, window_bounds = array<i64: 1, 1, 128, 128>}, {transform_indices = @v_fn, window_bounds = array<i64: 1, 1, 128, 64>}, {transform_indices = @oi_fn, window_bounds = array<i64: 1, 1, 128, 64>}]} {
    %c0 = arith.constant 0 : index
    %c0_i32 = arith.constant 0 : i32
    %0 = arith.cmpi eq, %c0_i32, %arg3 : i32
    scf.if %0 {
      %cst_3 = arith.constant dense<0.000000e+00> : vector<1x1x128x64xf32>
      vector.store %cst_3, %arg6[%c0, %c0, %c0, %c0] : memref<1x1x128x64xf32, #tpu.memory_space<vmem>>, vector<1x1x128x64xf32>
      %cst_4 = arith.constant dense<0xFF800000> : vector<1x1x128x1xf32>
      vector.store %cst_4, %arg7[%c0, %c0, %c0, %c0] : memref<1x1x128x1xf32, #tpu.memory_space<vmem>>, vector<1x1x128x1xf32>
      %cst_5 = arith.constant dense<0.000000e+00> : vector<1x1x128x1xf32>
      vector.store %cst_5, %arg8[%c0, %c0, %c0, %c0] : memref<1x1x128x1xf32, #tpu.memory_space<vmem>>, vector<1x1x128x1xf32>
    }
    %1 = vector.load %arg4[%c0, %c0, %c0, %c0] : memref<1x1x128x128xf32, #tpu.memory_space<vmem>>, vector<1x1x128x128xf32>
    %cst = arith.constant dense<0xFF800000> : vector<1x1x128xf32>
    %2 = vector.multi_reduction <maximumf>, %1, %cst [3] : vector<1x1x128x128xf32> to vector<1x1x128xf32>
    %3 = vector.shape_cast %2 : vector<1x1x128xf32> to vector<1x1x128x1xf32>
    %4 = vector.load %arg7[%c0, %c0, %c0, %c0] : memref<1x1x128x1xf32, #tpu.memory_space<vmem>>, vector<1x1x128x1xf32>
    %5 = arith.maximumf %4, %3 : vector<1x1x128x1xf32>
    %cst_0 = arith.constant dense<0.000000e+00> : vector<1x1x128x1xf32>
    %6 = arith.cmpf oeq, %4, %5 : vector<1x1x128x1xf32>
    %7 = arith.subf %4, %5 : vector<1x1x128x1xf32>
    %8 = arith.select %6, %cst_0, %7 : vector<1x1x128x1xi1>, vector<1x1x128x1xf32>
    %9 = vector.broadcast %5 : vector<1x1x128x1xf32> to vector<1x1x128x128xf32>
    %10 = arith.subf %1, %9 : vector<1x1x128x128xf32>
    %11 = math.exp %10 : vector<1x1x128x128xf32>
    %cst_1 = arith.constant dense<0.000000e+00> : vector<1x1x128xf32>
    %12 = vector.multi_reduction <add>, %11, %cst_1 [3] : vector<1x1x128x128xf32> to vector<1x1x128xf32>
    %13 = vector.shape_cast %12 : vector<1x1x128xf32> to vector<1x1x128x1xf32>
    %14 = vector.load %arg8[%c0, %c0, %c0, %c0] : memref<1x1x128x1xf32, #tpu.memory_space<vmem>>, vector<1x1x128x1xf32>
    %15 = math.exp %8 : vector<1x1x128x1xf32>
    %16 = arith.mulf %15, %14 : vector<1x1x128x1xf32>
    %17 = arith.addf %16, %13 : vector<1x1x128x1xf32>
    %18 = vector.load %arg6[%c0, %c0, %c0, %c0] : memref<1x1x128x64xf32, #tpu.memory_space<vmem>>, vector<1x1x128x64xf32>
    %19 = math.exp %8 : vector<1x1x128x1xf32>
    %20 = arith.mulf %19, %14 : vector<1x1x128x1xf32>
    %21 = vector.broadcast %20 : vector<1x1x128x1xf32> to vector<1x1x128x64xf32>
    %22 = arith.mulf %21, %18 : vector<1x1x128x64xf32>
    %23 = vector.load %arg5[%c0, %c0, %c0, %c0] : memref<1x1x128x64xf32, #tpu.memory_space<vmem>>, vector<1x1x128x64xf32>
    %24 = vector.shape_cast %23 : vector<1x1x128x64xf32> to vector<128x64xf32>
    %25 = vector.shape_cast %11 : vector<1x1x128x128xf32> to vector<128x128xf32>
    %26 = vector.shape_cast %22 : vector<1x1x128x64xf32> to vector<128x64xf32>
    %27 = tpu.matmul %25, %24, %26 {dimension_numbers = #tpu.dot_dimension_numbers<[1], [0], [0], [1], [0, 0, 1, 1], [], []>, precision = #tpu.contract_precision<bf16>} : vector<128x128xf32>, vector<128x64xf32>, vector<128x64xf32> -> vector<128x64xf32>
    %28 = vector.shape_cast %27 : vector<128x64xf32> to vector<1x1x128x64xf32>
    %cst_2 = arith.constant dense<1.000000e+00> : vector<1x1x128x1xf32>
    %29 = arith.divf %cst_2, %17 : vector<1x1x128x1xf32>
    %30 = vector.broadcast %29 : vector<1x1x128x1xf32> to vector<1x1x128x64xf32>
    %31 = arith.mulf %28, %30 : vector<1x1x128x64xf32>
    %32 = vector.shape_cast %31 : vector<1x1x128x64xf32> to vector<1x1x128x64xf32>
    vector.store %32, %arg6[%c0, %c0, %c0, %c0] : memref<1x1x128x64xf32, #tpu.memory_space<vmem>>, vector<1x1x128x64xf32>
    vector.store %5, %arg7[%c0, %c0, %c0, %c0] : memref<1x1x128x1xf32, #tpu.memory_space<vmem>>, vector<1x1x128x1xf32>
    vector.store %17, %arg8[%c0, %c0, %c0, %c0] : memref<1x1x128x1xf32, #tpu.memory_space<vmem>>, vector<1x1x128x1xf32>
    return
  }
  func.func @qk_fn(%arg0: i32, %arg1: i32, %arg2: i32, %arg3: i32) -> (i32, i32, i32, i32) {
    return %arg0, %arg1, %arg2, %arg3 : i32, i32, i32, i32
  }
  func.func @v_fn(%arg0: i32, %arg1: i32, %arg2: i32, %arg3: i32) -> (i32, i32, i32, i32) {
    %c0_i32 = arith.constant 0 : i32
    return %arg0, %arg1, %arg3, %c0_i32 : i32, i32, i32, i32
  }
  func.func @oi_fn(%arg0: i32, %arg1: i32, %arg2: i32, %arg3: i32) -> (i32, i32, i32, i32) {
    %c0_i32 = arith.constant 0 : i32
    return %arg0, %arg1, %arg2, %c0_i32 : i32, i32, i32, i32
  }
}

module {
  func.func @main(%arg0: i32, %arg1: i32, %arg2: i32, %arg3: memref<1x128x128xf32, #tpu.memory_space<vmem>>, %arg4: memref<1x128x64xf32, #tpu.memory_space<vmem>>, %arg5: memref<1x128x64xf32, #tpu.memory_space<vmem>>, %arg6: memref<1x128x1xf32, #tpu.memory_space<vmem>>, %arg7: memref<1x128x1xf32, #tpu.memory_space<vmem>>) attributes {dimension_semantics = [#tpu.dimension_semantics<parallel>, #tpu.dimension_semantics<parallel>, #tpu.dimension_semantics<arbitrary>], iteration_bounds = array<i64: 2, 1, 1>, scratch_operands = 2 : i64, window_params = [{transform_indices = @qk_fn, window_bounds = array<i64: 1, 128, 128>}, {transform_indices = @v_fn, window_bounds = array<i64: 1, 128, 64>}, {transform_indices = @oi_fn, window_bounds = array<i64: 1, 128, 64>}]} {
    %c0 = arith.constant 0 : index
    %c0_i32 = arith.constant 0 : i32
    %0 = arith.cmpi eq, %c0_i32, %arg2 : i32
    scf.if %0 {
      %cst_3 = arith.constant dense<0.000000e+00> : vector<1x128x64xf32>
      vector.store %cst_3, %arg5[%c0, %c0, %c0] : memref<1x128x64xf32, #tpu.memory_space<vmem>>, vector<1x128x64xf32>
      %cst_4 = arith.constant dense<0xFF800000> : vector<1x128x1xf32>
      vector.store %cst_4, %arg6[%c0, %c0, %c0] : memref<1x128x1xf32, #tpu.memory_space<vmem>>, vector<1x128x1xf32>
      %cst_5 = arith.constant dense<0.000000e+00> : vector<1x128x1xf32>
      vector.store %cst_5, %arg7[%c0, %c0, %c0] : memref<1x128x1xf32, #tpu.memory_space<vmem>>, vector<1x128x1xf32>
    }
    %1 = vector.load %arg3[%c0, %c0, %c0] : memref<1x128x128xf32, #tpu.memory_space<vmem>>, vector<1x128x128xf32>
    %cst = arith.constant dense<0xFF800000> : vector<1x128xf32>
    %2 = vector.multi_reduction <maximumf>, %1, %cst [2] : vector<1x128x128xf32> to vector<1x128xf32>
    %3 = vector.shape_cast %2 : vector<1x128xf32> to vector<1x128x1xf32>
    %4 = vector.load %arg6[%c0, %c0, %c0] : memref<1x128x1xf32, #tpu.memory_space<vmem>>, vector<1x128x1xf32>
    %5 = arith.maximumf %4, %3 : vector<1x128x1xf32>
    %cst_0 = arith.constant dense<0.000000e+00> : vector<1x128x1xf32>
    %6 = arith.cmpf oeq, %4, %5 : vector<1x128x1xf32>
    %7 = arith.subf %4, %5 : vector<1x128x1xf32>
    %8 = arith.select %6, %cst_0, %7 : vector<1x128x1xi1>, vector<1x128x1xf32>
    %9 = vector.broadcast %5 : vector<1x128x1xf32> to vector<1x128x128xf32>
    %10 = arith.subf %1, %9 : vector<1x128x128xf32>
    %11 = math.exp %10 : vector<1x128x128xf32>
    %cst_1 = arith.constant dense<0.000000e+00> : vector<1x128xf32>
    %12 = vector.multi_reduction <add>, %11, %cst_1 [2] : vector<1x128x128xf32> to vector<1x128xf32>
    %13 = vector.shape_cast %12 : vector<1x128xf32> to vector<1x128x1xf32>
    %14 = vector.load %arg7[%c0, %c0, %c0] : memref<1x128x1xf32, #tpu.memory_space<vmem>>, vector<1x128x1xf32>
    %15 = math.exp %8 : vector<1x128x1xf32>
    %16 = arith.mulf %15, %14 : vector<1x128x1xf32>
    %17 = arith.addf %16, %13 : vector<1x128x1xf32>
    %18 = vector.load %arg5[%c0, %c0, %c0] : memref<1x128x64xf32, #tpu.memory_space<vmem>>, vector<1x128x64xf32>
    %19 = math.exp %8 : vector<1x128x1xf32>
    %20 = arith.mulf %19, %14 : vector<1x128x1xf32>
    %21 = vector.broadcast %20 : vector<1x128x1xf32> to vector<1x128x64xf32>
    %22 = arith.mulf %21, %18 : vector<1x128x64xf32>
    %23 = vector.load %arg4[%c0, %c0, %c0] : memref<1x128x64xf32, #tpu.memory_space<vmem>>, vector<1x128x64xf32>
    %24 = vector.shape_cast %23 : vector<1x128x64xf32> to vector<128x64xf32>
    %25 = vector.shape_cast %11 : vector<1x128x128xf32> to vector<128x128xf32>
    %26 = vector.shape_cast %22 : vector<1x128x64xf32> to vector<128x64xf32>
    %27 = tpu.matmul %25, %24, %26 {dimension_numbers = #tpu.dot_dimension_numbers<[1], [0], [0], [1], [0, 0, 1, 1], [], []>, precision = #tpu.contract_precision<bf16>} : vector<128x128xf32>, vector<128x64xf32>, vector<128x64xf32> -> vector<128x64xf32>
    %28 = vector.shape_cast %27 : vector<128x64xf32> to vector<1x128x64xf32>
    %cst_2 = arith.constant dense<1.000000e+00> : vector<1x128x1xf32>
    %29 = arith.divf %cst_2, %17 : vector<1x128x1xf32>
    %30 = vector.broadcast %29 : vector<1x128x1xf32> to vector<1x128x64xf32>
    %31 = arith.mulf %28, %30 : vector<1x128x64xf32>
    %32 = vector.shape_cast %31 : vector<1x128x64xf32> to vector<1x128x64xf32>
    vector.store %32, %arg5[%c0, %c0, %c0] : memref<1x128x64xf32, #tpu.memory_space<vmem>>, vector<1x128x64xf32>
    vector.store %5, %arg6[%c0, %c0, %c0] : memref<1x128x1xf32, #tpu.memory_space<vmem>>, vector<1x128x1xf32>
    vector.store %17, %arg7[%c0, %c0, %c0] : memref<1x128x1xf32, #tpu.memory_space<vmem>>, vector<1x128x1xf32>
    return
  }
  func.func @qk_fn(%arg0: i32, %arg1: i32, %arg2: i32) -> (i32, i32, i32) {
    return %arg0, %arg1, %arg2 : i32, i32, i32
  }
  func.func @v_fn(%arg0: i32, %arg1: i32, %arg2: i32) -> (i32, i32, i32) {
    %c0_i32 = arith.constant 0 : i32
    return %arg0, %arg2, %c0_i32 : i32, i32, i32
  }
  func.func @oi_fn(%arg0: i32, %arg1: i32, %arg2: i32) -> (i32, i32, i32) {
    %c0_i32 = arith.constant 0 : i32
    return %arg0, %arg1, %c0_i32 : i32, i32, i32
  }
}

</mosaic_0001>

<llo_original>
// kernel: online-softmax
$region0: #{online-softmax}
  #allocation0 [shape = 'u32[]', space=smem, size = 0x4, offset = 0x4, fixed_abs, tag = 'smem constant byte address 0x4 - core index']
  #allocation1 [shape = 'u32[72,128]{1,0:T(1,128)}', space=vmem, size = 0x9000, scoped, tag = 'internal scratch']
  #allocation2 [shape = 'f32[1,1,128,1]{3,2,1,0:T(8,128)}', space=vmem, size = 0x10000, scoped, tag = 'scratch operand']
  #allocation3 [shape = 'f32[1,1,128,1]{3,2,1,0:T(8,128)}', space=vmem, size = 0x10000, scoped, tag = 'scratch operand']
  %s0 = inlined_call_operand.vmem [shape: f32[2,3,128,128], index: 0, kind: input, shape index: {}]
  %s1 = inlined_call_operand.vmem [shape: f32[2,3,128,64], index: 1, kind: input, shape index: {}]
  %s2 = inlined_call_operand.vmem [shape: f32[2,3,128,64], index: 2, kind: output, shape index: {}]
  %s3 = sld [smem:[#allocation0]]
  $region45: #{online-softmax} parent=0
    _
  %s5 = ssub.s32 1, %s3
  %s6 = scalar_select 0, %s5, %s3
  loop: start=0, step=1, limit=8
  $region2: #{online-softmax} parent=0 // loop_pre_header
    _
  $region3: #{online-softmax} parent=0 // loop_header
    %s8 = sphi 0, %s12
    %p9 = scmp.ge.s32.totalorder %s8, 8
    %s15 = sphi 0, %s41
    %s16 = sphi 0, %s37
    %s17 = sphi 0, %s33
    %s18 = sphi 0, %s29
    %s19 = sphi 0, %s15
    %s20 = sphi 0, %s16
    %s21 = sphi 0, %s17
    %s22 = sphi 0, %s18
    %s23 = sphi 0, %s19
    %s24 = sphi 0, %s20
    %s25 = sphi 0, %s21
    %s26 = sphi 0, %s22
    %s50 = sphi 0, %s52
    %s53 = sphi 0, %s50
    %s54 = sphi 0, %s53
    %s70 = sphi 0, %s54
    %s80 = sphi 0, %s82
    %s83 = sphi 0, %s80
    %s84 = sphi 0, %s83
    %s100 = sphi 0, %s84
    %s110 = sphi 0, %s112
    %s113 = sphi 0, %s110
    %s114 = sphi 0, %s113
    %s130 = sphi 0, %s114
  $region4: #{online-softmax} parent=0 // loop_header_branch
    %11 = sbr.rel (%p9) target = $region8
  $region5: #{online-softmax} parent=0 // loop_body
    %s13 = ssub.s32 %s8, 1
    %s14 = ssub.s32 %s8, 2
    %s27 = sadd.s32 1, %s18
    %p28 = scmp.ge.s32.totalorder %s27, 1
    %s29 = scalar_select %p28, 0, %s27
    %s30 = sadd.s32 1, %s17
    %s31 = scalar_select %p28, %s30, %s17
    %p32 = scmp.ge.s32.totalorder %s31, 1
    %s33 = scalar_select %p32, 0, %s31
    %s34 = sadd.s32 1, %s16
    %s35 = scalar_select %p32, %s34, %s16
    %p36 = scmp.ge.s32.totalorder %s35, 3
    %s37 = scalar_select %p36, 0, %s35
    %s38 = sadd.s32 1, %s15
    %s39 = scalar_select %p36, %s38, %s15
    %p40 = scmp.ge.s32.totalorder %s39, 2
    %s41 = scalar_select %p40, 0, %s39
    %s42 = ssub.s32 %s15, %s41
    %s43 = ssub.s32 %s16, %s37
    %s44 = sor.u32 %s42, %s43
    %s45 = ssub.s32 %s17, %s33
    %s46 = sor.u32 %s44, %s45
    %s47 = ssub.s32 %s18, %s29
    %s48 = sor.u32 %s46, %s47
    %p49 = scmp.eq.s32.totalorder %s48, 0
    %s51 = sadd.s32 %s50, 1
    %s52 = scalar_select %p49, %s50, %s51
    %p55 = pneg %p49
    %p56 = scmp.eq.s32.totalorder %s8, 5
    %p57 = por %p55, %p56
    %p58 = scmp.ne.s32.totalorder %s50, %s53
    %p59 = scmp.eq.s32.totalorder %s8, 0
    %p60 = por %p58, %p59
    %p61 = scmp.ne.s32.totalorder %s50, %s53
    %p62 = scmp.eq.s32.totalorder %s13, 5
    %p63 = por %p61, %p62
    %p64 = scmp.ne.s32.totalorder %s53, %s54
    %p65 = scmp.eq.s32.totalorder %s13, 0
    %p66 = por %p64, %p65
    %p67 = scmp.ne.s32.totalorder %s53, %s54
    %p68 = scmp.eq.s32.totalorder %s14, 5
    %p69 = por %p67, %p68
    %p71 = scmp.ne.s32.totalorder %s54, %s70
    %p72 = scmp.eq.s32.totalorder %s14, 0
    %p73 = por %p71, %p72
    %s74 = ssub.s32 %s15, %s41
    %s75 = ssub.s32 %s16, %s37
    %s76 = sor.u32 %s74, %s75
    %s77 = ssub.s32 %s18, %s29
    %s78 = sor.u32 %s76, %s77
    %p79 = scmp.eq.s32.totalorder %s78, 0
    %s81 = sadd.s32 %s80, 1
    %s82 = scalar_select %p79, %s80, %s81
    %p85 = pneg %p79
    %p86 = scmp.eq.s32.totalorder %s8, 5
    %p87 = por %p85, %p86
    %p88 = scmp.ne.s32.totalorder %s80, %s83
    %p89 = scmp.eq.s32.totalorder %s8, 0
    %p90 = por %p88, %p89
    %p91 = scmp.ne.s32.totalorder %s80, %s83
    %p92 = scmp.eq.s32.totalorder %s13, 5
    %p93 = por %p91, %p92
    %p94 = scmp.ne.s32.totalorder %s83, %s84
    %p95 = scmp.eq.s32.totalorder %s13, 0
    %p96 = por %p94, %p95
    %p97 = scmp.ne.s32.totalorder %s83, %s84
    %p98 = scmp.eq.s32.totalorder %s14, 5
    %p99 = por %p97, %p98
    %p101 = scmp.ne.s32.totalorder %s84, %s100
    %p102 = scmp.eq.s32.totalorder %s14, 0
    %p103 = por %p101, %p102
    %s104 = ssub.s32 %s15, %s41
    %s105 = ssub.s32 %s16, %s37
    %s106 = sor.u32 %s104, %s105
    %s107 = ssub.s32 %s17, %s33
    %s108 = sor.u32 %s106, %s107
    %p109 = scmp.eq.s32.totalorder %s108, 0
    %s111 = sadd.s32 %s110, 1
    %s112 = scalar_select %p109, %s110, %s111
    %p115 = pneg %p109
    %p116 = scmp.eq.s32.totalorder %s8, 5
    %p117 = por %p115, %p116
    %p118 = scmp.ne.s32.totalorder %s110, %s113
    %p119 = scmp.eq.s32.totalorder %s8, 0
    %p120 = por %p118, %p119
    %p121 = scmp.ne.s32.totalorder %s110, %s113
    %p122 = scmp.eq.s32.totalorder %s13, 5
    %p123 = por %p121, %p122
    %p124 = scmp.ne.s32.totalorder %s113, %s114
    %p125 = scmp.eq.s32.totalorder %s13, 0
    %p126 = por %p124, %p125
    %p127 = scmp.ne.s32.totalorder %s113, %s114
    %p128 = scmp.eq.s32.totalorder %s14, 5
    %p129 = por %p127, %p128
    %p131 = scmp.ne.s32.totalorder %s114, %s130
    %p132 = scmp.eq.s32.totalorder %s14, 0
    %p133 = por %p131, %p132
    %p134 = scmp.le.s32.totalorder 1, %s8
    %p135 = scmp.lt.s32.totalorder %s8, 7
    %p136 = pnand %p134, %p135
    %p137 = pneg %p136
    // Predicated region
    $region9: #{online-softmax} parent=5 // pred_check
      _
    $region10: #{online-softmax} parent=5 // pred_check_branch
      %139 = sbr.rel (%p136) target = $region12
    $region11: #{online-softmax} parent=5 // pred_region
      %s140 = ssub.s32 %s8, 1
    $region12: #{online-softmax} parent=5 // pred_fallthru
      _
    %p141 = scmp.lt.s32.totalorder %s8, 6
    // Predicated region
    $region13: #{online-softmax} parent=5 // pred_check
      %p142 = pneg %p141
    $region14: #{online-softmax} parent=5 // pred_check_branch
      %144 = sbr.rel (%p142) target = $region16
    $region15: #{online-softmax} parent=5 // pred_region
      // Predicated region
      $region17: #{online-softmax} parent=15 // pred_check
        %p145 = pneg %p60
      $region18: #{online-softmax} parent=15 // pred_check_branch
        %147 = sbr.rel (%p145) target = $region20
      $region19: #{online-softmax} parent=15 // pred_region
        %s148 = smul.u32 16, %s17
        %p149 = scmp.lt.s32.totalorder %s15, 1
        %s150 = scalar_select %p149, %s15, 1
        %p151 = scmp.lt.s32.totalorder %s16, 2
        %s152 = scalar_select %p151, %s16, 2
        %p153 = scmp.lt.s32.totalorder %s148, 15
        %s154 = scalar_select %p153, %s148, 15
        %p155 = scmp.lt.s32.totalorder %s18, 0
        %s156 = scalar_select %p155, %s18, 0
        %s157 = sadd.s32 %s156, %s154
        %s158 = smul.addr %s152, 16
        %s159 = sadd.s32 %s157, %s158
        %s160 = smul.addr %s150, 48
        %s161 = sadd.s32 %s159, %s160
        %s162 = smul.addr %s161, 8
        %s163 = scalar_lea.vmem %s0, %s162
        %s164 = smul.u32 16, %s17
      $region20: #{online-softmax} parent=15 // pred_fallthru
        _
      // Predicated region
      $region21: #{online-softmax} parent=15 // pred_check
        %p165 = pneg %p90
      $region22: #{online-softmax} parent=15 // pred_check_branch
        %167 = sbr.rel (%p165) target = $region24
      $region23: #{online-softmax} parent=15 // pred_region
        %s168 = smul.u32 16, %s18
        %p169 = scmp.lt.s32.totalorder %s15, 1
        %s170 = scalar_select %p169, %s15, 1
        %p171 = scmp.lt.s32.totalorder %s16, 2
        %s172 = scalar_select %p171, %s16, 2
        %p173 = scmp.lt.s32.totalorder %s168, 15
        %s174 = scalar_select %p173, %s168, 15
        %s175 = smul.addr %s172, 16
        %s176 = sadd.s32 %s174, %s175
        %s177 = smul.addr %s170, 48
        %s178 = sadd.s32 %s176, %s177
        %s179 = smul.addr %s178, 8
        %s180 = scalar_lea.vmem %s1, %s179
        %s181 = smul.u32 16, %s18
      $region24: #{online-softmax} parent=15 // pred_fallthru
        _
    $region16: #{online-softmax} parent=5 // pred_fallthru
      _
    %p182 = scmp.le.s32.totalorder 1, %s8
    %p183 = scmp.lt.s32.totalorder %s8, 7
    %p184 = pnand %p182, %p183
    %p185 = pneg %p184
    // Predicated region
    $region25: #{online-softmax} parent=5 // pred_check
      _
    $region26: #{online-softmax} parent=5 // pred_check_branch
      %187 = sbr.rel (%p184) target = $region28
    $region27: #{online-softmax} parent=5 // pred_region
      %s188 = ssub.s32 %s8, 1
      %s189 = smul.u32 16, %s21
      %p190 = scmp.lt.s32.totalorder %s19, 1
      %s191 = scalar_select %p190, %s19, 1
      %p192 = scmp.lt.s32.totalorder %s20, 2
      %s193 = scalar_select %p192, %s20, 2
      %p194 = scmp.lt.s32.totalorder %s189, 15
      %s195 = scalar_select %p194, %s189, 15
      %p196 = scmp.lt.s32.totalorder %s22, 0
      %s197 = scalar_select %p196, %s22, 0
      %s198 = sadd.s32 %s197, %s195
      %s199 = smul.addr %s193, 16
      %s200 = sadd.s32 %s198, %s199
      %s201 = smul.addr %s191, 48
      %s202 = sadd.s32 %s200, %s201
      %s203 = smul.addr %s202, 8
      %s204 = scalar_lea.vmem %s0, %s203
      %p205 = pneg %p66
      %p206 = pneg %p63
      %s207 = smul.u32 16, %s22
      %p208 = scmp.lt.s32.totalorder %s19, 1
      %s209 = scalar_select %p208, %s19, 1
      %p210 = scmp.lt.s32.totalorder %s20, 2
      %s211 = scalar_select %p210, %s20, 2
      %p212 = scmp.lt.s32.totalorder %s207, 15
      %s213 = scalar_select %p212, %s207, 15
      %s214 = smul.addr %s211, 16
      %s215 = sadd.s32 %s213, %s214
      %s216 = smul.addr %s209, 48
      %s217 = sadd.s32 %s215, %s216
      %s218 = smul.addr %s217, 8
      %s219 = scalar_lea.vmem %s1, %s218
      %p220 = pneg %p96
      %p221 = pneg %p93
      %p222 = pneg %p126
      %p223 = pneg %p123
      %s224 = smul.u32 16, %s21
      %p225 = scmp.lt.s32.totalorder %s19, 1
      %s226 = scalar_select %p225, %s19, 1
      %p227 = scmp.lt.s32.totalorder %s20, 2
      %s228 = scalar_select %p227, %s20, 2
      %p229 = scmp.lt.s32.totalorder %s224, 15
      %s230 = scalar_select %p229, %s224, 15
      %s231 = smul.addr %s228, 16
      %s232 = sadd.s32 %s230, %s231
      %s233 = smul.addr %s226, 48
      %s234 = sadd.s32 %s232, %s233
      %s235 = smul.addr %s234, 8
      %s236 = scalar_lea.vmem %s2, %s235
      %s237 = smul.u32 16, %s21
      %p238 = scmp.lt.s32.totalorder %s19, 1
      %s239 = scalar_select %p238, %s19, 1
      %p240 = scmp.lt.s32.totalorder %s20, 2
      %s241 = scalar_select %p240, %s20, 2
      %p242 = scmp.lt.s32.totalorder %s237, 15
      %s243 = scalar_select %p242, %s237, 15
      %p244 = scmp.lt.s32.totalorder %s22, 0
      %s245 = scalar_select %p244, %s22, 0
      %s246 = sadd.s32 %s245, %s243
      %s247 = smul.addr %s241, 16
      %s248 = sadd.s32 %s246, %s247
      %s249 = smul.addr %s239, 48
      %s250 = sadd.s32 %s248, %s249
      %s251 = smul.addr %s250, 8
      %s252 = scalar_lea.vmem %s0, %s251
      %s253 = smul.u32 16, %s21
      %s254 = smul.u32 16, %s22
      %p255 = scmp.lt.s32.totalorder %s19, 1
      %s256 = scalar_select %p255, %s19, 1
      %p257 = scmp.lt.s32.totalorder %s20, 2
      %s258 = scalar_select %p257, %s20, 2
      %p259 = scmp.lt.s32.totalorder %s254, 15
      %s260 = scalar_select %p259, %s254, 15
      %s261 = smul.addr %s258, 16
      %s262 = sadd.s32 %s260, %s261
      %s263 = smul.addr %s256, 48
      %s264 = sadd.s32 %s262, %s263
      %s265 = smul.addr %s264, 8
      %s266 = scalar_lea.vmem %s1, %s265
      %s267 = smul.u32 16, %s22
      %s268 = smul.u32 16, %s21
      %p269 = scmp.lt.s32.totalorder %s19, 1
      %s270 = scalar_select %p269, %s19, 1
      %p271 = scmp.lt.s32.totalorder %s20, 2
      %s272 = scalar_select %p271, %s20, 2
      %p273 = scmp.lt.s32.totalorder %s268, 15
      %s274 = scalar_select %p273, %s268, 15
      %s275 = smul.addr %s272, 16
      %s276 = sadd.s32 %s274, %s275
      %s277 = smul.addr %s270, 48
      %s278 = sadd.s32 %s276, %s277
      %s279 = smul.addr %s278, 8
      %s280 = scalar_lea.vmem %s2, %s279
      %s281 = smul.u32 16, %s21
      %p282 = scmp.eq.s32.totalorder %s22, 0
      // Predicated region
      $region29: #{online-softmax} parent=27 // pred_check
        %p283 = pneg %p282
      $region30: #{online-softmax} parent=27 // pred_check_branch
        %285 = sbr.rel (%p283) target = $region32
      $region31: #{online-softmax} parent=27 // pred_region
        %vm286 = vcmask 523264
        %287 = vst.msk [vmem:[%s280] sm:$0xff] %vm286, 0.0
        %288 = vst.msk [vmem:[%s280 + $0x8] sm:$0xff] %vm286, 0.0
        %289 = vst.msk [vmem:[%s280 + $0x10] sm:$0xff] %vm286, 0.0
        %290 = vst.msk [vmem:[%s280 + $0x18] sm:$0xff] %vm286, 0.0
        %291 = vst.msk [vmem:[%s280 + $0x20] sm:$0xff] %vm286, 0.0
        %292 = vst.msk [vmem:[%s280 + $0x28] sm:$0xff] %vm286, 0.0
        %293 = vst.msk [vmem:[%s280 + $0x30] sm:$0xff] %vm286, 0.0
        %294 = vst.msk [vmem:[%s280 + $0x38] sm:$0xff] %vm286, 0.0
        %295 = vst.msk [vmem:[%s280 + $0x40] sm:$0xff] %vm286, 0.0
        %296 = vst.msk [vmem:[%s280 + $0x48] sm:$0xff] %vm286, 0.0
        %297 = vst.msk [vmem:[%s280 + $0x50] sm:$0xff] %vm286, 0.0
        %298 = vst.msk [vmem:[%s280 + $0x58] sm:$0xff] %vm286, 0.0
        %299 = vst.msk [vmem:[%s280 + $0x60] sm:$0xff] %vm286, 0.0
        %300 = vst.msk [vmem:[%s280 + $0x68] sm:$0xff] %vm286, 0.0
        %301 = vst.msk [vmem:[%s280 + $0x70] sm:$0xff] %vm286, 0.0
        %302 = vst.msk [vmem:[%s280 + $0x78] sm:$0xff] %vm286, 0.0
        %vm303 = vcmask 7168
        %304 = vst.msk [vmem:[#allocation2] sm:$0xff] %vm303, -inf
        %305 = vst.msk [vmem:[#allocation2 + $0x8] sm:$0xff] %vm303, -inf
        %306 = vst.msk [vmem:[#allocation2 + $0x10] sm:$0xff] %vm303, -inf
        %307 = vst.msk [vmem:[#allocation2 + $0x18] sm:$0xff] %vm303, -inf
        %308 = vst.msk [vmem:[#allocation2 + $0x20] sm:$0xff] %vm303, -inf
        %309 = vst.msk [vmem:[#allocation2 + $0x28] sm:$0xff] %vm303, -inf
        %310 = vst.msk [vmem:[#allocation2 + $0x30] sm:$0xff] %vm303, -inf
        %311 = vst.msk [vmem:[#allocation2 + $0x38] sm:$0xff] %vm303, -inf
        %312 = vst.msk [vmem:[#allocation2 + $0x40] sm:$0xff] %vm303, -inf
        %313 = vst.msk [vmem:[#allocation2 + $0x48] sm:$0xff] %vm303, -inf
        %314 = vst.msk [vmem:[#allocation2 + $0x50] sm:$0xff] %vm303, -inf
        %315 = vst.msk [vmem:[#allocation2 + $0x58] sm:$0xff] %vm303, -inf
        %316 = vst.msk [vmem:[#allocation2 + $0x60] sm:$0xff] %vm303, -inf
        %317 = vst.msk [vmem:[#allocation2 + $0x68] sm:$0xff] %vm303, -inf
        %318 = vst.msk [vmem:[#allocation2 + $0x70] sm:$0xff] %vm303, -inf
        %319 = vst.msk [vmem:[#allocation2 + $0x78] sm:$0xff] %vm303, -inf
        %320 = vst.msk [vmem:[#allocation3] sm:$0xff] %vm303, 0.0
        %321 = vst.msk [vmem:[#allocation3 + $0x8] sm:$0xff] %vm303, 0.0
        %322 = vst.msk [vmem:[#allocation3 + $0x10] sm:$0xff] %vm303, 0.0
        %323 = vst.msk [vmem:[#allocation3 + $0x18] sm:$0xff] %vm303, 0.0
        %324 = vst.msk [vmem:[#allocation3 + $0x20] sm:$0xff] %vm303, 0.0
        %325 = vst.msk [vmem:[#allocation3 + $0x28] sm:$0xff] %vm303, 0.0
        %326 = vst.msk [vmem:[#allocation3 + $0x30] sm:$0xff] %vm303, 0.0
        %327 = vst.msk [vmem:[#allocation3 + $0x38] sm:$0xff] %vm303, 0.0
        %328 = vst.msk [vmem:[#allocation3 + $0x40] sm:$0xff] %vm303, 0.0
        %329 = vst.msk [vmem:[#allocation3 + $0x48] sm:$0xff] %vm303, 0.0
        %330 = vst.msk [vmem:[#allocation3 + $0x50] sm:$0xff] %vm303, 0.0
        %331 = vst.msk [vmem:[#allocation3 + $0x58] sm:$0xff] %vm303, 0.0
        %332 = vst.msk [vmem:[#allocation3 + $0x60] sm:$0xff] %vm303, 0.0
        %333 = vst.msk [vmem:[#allocation3 + $0x68] sm:$0xff] %vm303, 0.0
        %334 = vst.msk [vmem:[#allocation3 + $0x70] sm:$0xff] %vm303, 0.0
        %335 = vst.msk [vmem:[#allocation3 + $0x78] sm:$0xff] %vm303, 0.0
      $region32: #{online-softmax} parent=27 // pred_fallthru
        _
      %v336 = vld [vmem:[%s252] sm:$0xff]
      %v337 = vld [vmem:[%s252 + $0x8] sm:$0xff]
      %v338 = vld [vmem:[%s252 + $0x10] sm:$0xff]
      %v339 = vld [vmem:[%s252 + $0x18] sm:$0xff]
      %v340 = vld [vmem:[%s252 + $0x20] sm:$0xff]
      %v341 = vld [vmem:[%s252 + $0x28] sm:$0xff]
      %v342 = vld [vmem:[%s252 + $0x30] sm:$0xff]
      %v343 = vld [vmem:[%s252 + $0x38] sm:$0xff]
      %v344 = vld [vmem:[%s252 + $0x40] sm:$0xff]
      %v345 = vld [vmem:[%s252 + $0x48] sm:$0xff]
      %v346 = vld [vmem:[%s252 + $0x50] sm:$0xff]
      %v347 = vld [vmem:[%s252 + $0x58] sm:$0xff]
      %v348 = vld [vmem:[%s252 + $0x60] sm:$0xff]
      %v349 = vld [vmem:[%s252 + $0x68] sm:$0xff]
      %v350 = vld [vmem:[%s252 + $0x70] sm:$0xff]
      %v351 = vld [vmem:[%s252 + $0x78] sm:$0xff]
      %352 = vmax.xlane.f32.xlu0 %v336
      %v353 = vpop.xlane.xlu0 %352
      %354 = vmax.xlane.f32.xlu0 %v337
      %v355 = vpop.xlane.xlu0 %354
      %356 = vmax.xlane.f32.xlu0 %v338
      %v357 = vpop.xlane.xlu0 %356
      %358 = vmax.xlane.f32.xlu0 %v339
      %v359 = vpop.xlane.xlu0 %358
      %360 = vmax.xlane.f32.xlu0 %v340
      %v361 = vpop.xlane.xlu0 %360
      %362 = vmax.xlane.f32.xlu0 %v341
      %v363 = vpop.xlane.xlu0 %362
      %364 = vmax.xlane.f32.xlu0 %v342
      %v365 = vpop.xlane.xlu0 %364
      %366 = vmax.xlane.f32.xlu0 %v343
      %v367 = vpop.xlane.xlu0 %366
      %368 = vmax.xlane.f32.xlu0 %v344
      %v369 = vpop.xlane.xlu0 %368
      %370 = vmax.xlane.f32.xlu0 %v345
      %v371 = vpop.xlane.xlu0 %370
      %372 = vmax.xlane.f32.xlu0 %v346
      %v373 = vpop.xlane.xlu0 %372
      %374 = vmax.xlane.f32.xlu0 %v347
      %v375 = vpop.xlane.xlu0 %374
      %376 = vmax.xlane.f32.xlu0 %v348
      %v377 = vpop.xlane.xlu0 %376
      %378 = vmax.xlane.f32.xlu0 %v349
      %v379 = vpop.xlane.xlu0 %378
      %380 = vmax.xlane.f32.xlu0 %v350
      %v381 = vpop.xlane.xlu0 %380
      %382 = vmax.xlane.f32.xlu0 %v351
      %v383 = vpop.xlane.xlu0 %382
      %v384 = vld [vmem:[#allocation2] sm:$0xff]
      %v385 = vld [vmem:[#allocation2 + $0x8] sm:$0xff]
      %v386 = vld [vmem:[#allocation2 + $0x10] sm:$0xff]
      %v387 = vld [vmem:[#allocation2 + $0x18] sm:$0xff]
      %v388 = vld [vmem:[#allocation2 + $0x20] sm:$0xff]
      %v389 = vld [vmem:[#allocation2 + $0x28] sm:$0xff]
      %v390 = vld [vmem:[#allocation2 + $0x30] sm:$0xff]
      %v391 = vld [vmem:[#allocation2 + $0x38] sm:$0xff]
      %v392 = vld [vmem:[#allocation2 + $0x40] sm:$0xff]
      %v393 = vld [vmem:[#allocation2 + $0x48] sm:$0xff]
      %v394 = vld [vmem:[#allocation2 + $0x50] sm:$0xff]
      %v395 = vld [vmem:[#allocation2 + $0x58] sm:$0xff]
      %v396 = vld [vmem:[#allocation2 + $0x60] sm:$0xff]
      %v397 = vld [vmem:[#allocation2 + $0x68] sm:$0xff]
      %v398 = vld [vmem:[#allocation2 + $0x70] sm:$0xff]
      %v399 = vld [vmem:[#allocation2 + $0x78] sm:$0xff]
      %v400 = vmax.f32 %v384, %v353
      %v401 = vmax.f32 %v385, %v355
      %v402 = vmax.f32 %v386, %v357
      %v403 = vmax.f32 %v387, %v359
      %v404 = vmax.f32 %v388, %v361
      %v405 = vmax.f32 %v389, %v363
      %v406 = vmax.f32 %v390, %v365
      %v407 = vmax.f32 %v391, %v367
      %v408 = vmax.f32 %v392, %v369
      %v409 = vmax.f32 %v393, %v371
      %v410 = vmax.f32 %v394, %v373
      %v411 = vmax.f32 %v395, %v375
      %v412 = vmax.f32 %v396, %v377
      %v413 = vmax.f32 %v397, %v379
      %v414 = vmax.f32 %v398, %v381
      %v415 = vmax.f32 %v399, %v383
      %vm416 = vcmp.eq.f32.partialorder %v384, %v400
      %vm417 = vcmp.eq.f32.partialorder %v385, %v401
      %vm418 = vcmp.eq.f32.partialorder %v386, %v402
      %vm419 = vcmp.eq.f32.partialorder %v387, %v403
      %vm420 = vcmp.eq.f32.partialorder %v388, %v404
      %vm421 = vcmp.eq.f32.partialorder %v389, %v405
      %vm422 = vcmp.eq.f32.partialorder %v390, %v406
      %vm423 = vcmp.eq.f32.partialorder %v391, %v407
      %vm424 = vcmp.eq.f32.partialorder %v392, %v408
      %vm425 = vcmp.eq.f32.partialorder %v393, %v409
      %vm426 = vcmp.eq.f32.partialorder %v394, %v410
      %vm427 = vcmp.eq.f32.partialorder %v395, %v411
      %vm428 = vcmp.eq.f32.partialorder %v396, %v412
      %vm429 = vcmp.eq.f32.partialorder %v397, %v413
      %vm430 = vcmp.eq.f32.partialorder %v398, %v414
      %vm431 = vcmp.eq.f32.partialorder %v399, %v415
      %v432 = vsub.f32 %v384, %v400
      %v433 = vsub.f32 %v385, %v401
      %v434 = vsub.f32 %v386, %v402
      %v435 = vsub.f32 %v387, %v403
      %v436 = vsub.f32 %v388, %v404
      %v437 = vsub.f32 %v389, %v405
      %v438 = vsub.f32 %v390, %v406
      %v439 = vsub.f32 %v391, %v407
      %v440 = vsub.f32 %v392, %v408
      %v441 = vsub.f32 %v393, %v409
      %v442 = vsub.f32 %v394, %v410
      %v443 = vsub.f32 %v395, %v411
      %v444 = vsub.f32 %v396, %v412
      %v445 = vsub.f32 %v397, %v413
      %v446 = vsub.f32 %v398, %v414
      %v447 = vsub.f32 %v399, %v415
      %v448 = vsel %vm416, 0.0, %v432
      %v449 = vsel %vm417, 0.0, %v433
      %v450 = vsel %vm418, 0.0, %v434
      %v451 = vsel %vm419, 0.0, %v435
      %v452 = vsel %vm420, 0.0, %v436
      %v453 = vsel %vm421, 0.0, %v437
      %v454 = vsel %vm422, 0.0, %v438
      %v455 = vsel %vm423, 0.0, %v439
      %v456 = vsel %vm424, 0.0, %v440
      %v457 = vsel %vm425, 0.0, %v441
      %v458 = vsel %vm426, 0.0, %v442
      %v459 = vsel %vm427, 0.0, %v443
      %v460 = vsel %vm428, 0.0, %v444
      %v461 = vsel %vm429, 0.0, %v445
      %v462 = vsel %vm430, 0.0, %v446
      %v463 = vsel %vm431, 0.0, %v447
      %465 = vset.pattern.permute.xlu0 0
      %466 = vperm.xlu0 %465, %v400
      %v467 = vpop.permute.xlu0 %466
      %470 = vset.pattern.permute.xlu0 0
      %471 = vperm.xlu0 %470, %v401
      %v472 = vpop.permute.xlu0 %471
      %475 = vset.pattern.permute.xlu0 0
      %476 = vperm.xlu0 %475, %v402
      %v477 = vpop.permute.xlu0 %476
      %480 = vset.pattern.permute.xlu0 0
      %481 = vperm.xlu0 %480, %v403
      %v482 = vpop.permute.xlu0 %481
      %485 = vset.pattern.permute.xlu0 0
      %486 = vperm.xlu0 %485, %v404
      %v487 = vpop.permute.xlu0 %486
      %490 = vset.pattern.permute.xlu0 0
      %491 = vperm.xlu0 %490, %v405
      %v492 = vpop.permute.xlu0 %491
      %495 = vset.pattern.permute.xlu0 0
      %496 = vperm.xlu0 %495, %v406
      %v497 = vpop.permute.xlu0 %496
      %500 = vset.pattern.permute.xlu0 0
      %501 = vperm.xlu0 %500, %v407
      %v502 = vpop.permute.xlu0 %501
      %505 = vset.pattern.permute.xlu0 0
      %506 = vperm.xlu0 %505, %v408
      %v507 = vpop.permute.xlu0 %506
      %510 = vset.pattern.permute.xlu0 0
      %511 = vperm.xlu0 %510, %v409
      %v512 = vpop.permute.xlu0 %511
      %515 = vset.pattern.permute.xlu0 0
      %516 = vperm.xlu0 %515, %v410
      %v517 = vpop.permute.xlu0 %516
      %520 = vset.pattern.permute.xlu0 0
      %521 = vperm.xlu0 %520, %v411
      %v522 = vpop.permute.xlu0 %521
      %525 = vset.pattern.permute.xlu0 0
      %526 = vperm.xlu0 %525, %v412
      %v527 = vpop.permute.xlu0 %526
      %530 = vset.pattern.permute.xlu0 0
      %531 = vperm.xlu0 %530, %v413
      %v532 = vpop.permute.xlu0 %531
      %535 = vset.pattern.permute.xlu0 0
      %536 = vperm.xlu0 %535, %v414
      %v537 = vpop.permute.xlu0 %536
      %540 = vset.pattern.permute.xlu0 0
      %541 = vperm.xlu0 %540, %v415
      %v542 = vpop.permute.xlu0 %541
      %v544 = vsub.f32 %v336, %v467
      %v545 = vsub.f32 %v337, %v472
      %v546 = vsub.f32 %v338, %v477
      %v547 = vsub.f32 %v339, %v482
      %v548 = vsub.f32 %v340, %v487
      %v549 = vsub.f32 %v341, %v492
      %v550 = vsub.f32 %v342, %v497
      %v551 = vsub.f32 %v343, %v502
      %v552 = vsub.f32 %v344, %v507
      %v553 = vsub.f32 %v345, %v512
      %v554 = vsub.f32 %v346, %v517
      %v555 = vsub.f32 %v347, %v522
      %v556 = vsub.f32 %v348, %v527
      %v557 = vsub.f32 %v349, %v532
      %v558 = vsub.f32 %v350, %v537
      %v559 = vsub.f32 %v351, %v542
      %v560 = vmul.f32 %v544, 1.442695
      %v561 = vpow.pop %v560
      %v562 = vmul.f32 %v545, 1.442695
      %v563 = vpow.pop %v562
      %v564 = vmul.f32 %v546, 1.442695
      %v565 = vpow.pop %v564
      %v566 = vmul.f32 %v547, 1.442695
      %v567 = vpow.pop %v566
      %v568 = vmul.f32 %v548, 1.442695
      %v569 = vpow.pop %v568
      %v570 = vmul.f32 %v549, 1.442695
      %v571 = vpow.pop %v570
      %v572 = vmul.f32 %v550, 1.442695
      %v573 = vpow.pop %v572
      %v574 = vmul.f32 %v551, 1.442695
      %v575 = vpow.pop %v574
      %v576 = vmul.f32 %v552, 1.442695
      %v577 = vpow.pop %v576
      %v578 = vmul.f32 %v553, 1.442695
      %v579 = vpow.pop %v578
      %v580 = vmul.f32 %v554, 1.442695
      %v581 = vpow.pop %v580
      %v582 = vmul.f32 %v555, 1.442695
      %v583 = vpow.pop %v582
      %v584 = vmul.f32 %v556, 1.442695
      %v585 = vpow.pop %v584
      %v586 = vmul.f32 %v557, 1.442695
      %v587 = vpow.pop %v586
      %v588 = vmul.f32 %v558, 1.442695
      %v589 = vpow.pop %v588
      %v590 = vmul.f32 %v559, 1.442695
      %v591 = vpow.pop %v590
      %592 = vadd.xlane.f32.xlu0 %v561
      %v593 = vpop.xlane.xlu0 %592
      %594 = vadd.xlane.f32.xlu0 %v563
      %v595 = vpop.xlane.xlu0 %594
      %596 = vadd.xlane.f32.xlu0 %v565
      %v597 = vpop.xlane.xlu0 %596
      %598 = vadd.xlane.f32.xlu0 %v567
      %v599 = vpop.xlane.xlu0 %598
      %600 = vadd.xlane.f32.xlu0 %v569
      %v601 = vpop.xlane.xlu0 %600
      %602 = vadd.xlane.f32.xlu0 %v571
      %v603 = vpop.xlane.xlu0 %602
      %604 = vadd.xlane.f32.xlu0 %v573
      %v605 = vpop.xlane.xlu0 %604
      %606 = vadd.xlane.f32.xlu0 %v575
      %v607 = vpop.xlane.xlu0 %606
      %608 = vadd.xlane.f32.xlu0 %v577
      %v609 = vpop.xlane.xlu0 %608
      %610 = vadd.xlane.f32.xlu0 %v579
      %v611 = vpop.xlane.xlu0 %610
      %612 = vadd.xlane.f32.xlu0 %v581
      %v613 = vpop.xlane.xlu0 %612
      %614 = vadd.xlane.f32.xlu0 %v583
      %v615 = vpop.xlane.xlu0 %614
      %616 = vadd.xlane.f32.xlu0 %v585
      %v617 = vpop.xlane.xlu0 %616
      %618 = vadd.xlane.f32.xlu0 %v587
      %v619 = vpop.xlane.xlu0 %618
      %620 = vadd.xlane.f32.xlu0 %v589
      %v621 = vpop.xlane.xlu0 %620
      %622 = vadd.xlane.f32.xlu0 %v591
      %v623 = vpop.xlane.xlu0 %622
      %v624 = vld [vmem:[#allocation3] sm:$0xff]
      %v625 = vld [vmem:[#allocation3 + $0x8] sm:$0xff]
      %v626 = vld [vmem:[#allocation3 + $0x10] sm:$0xff]
      %v627 = vld [vmem:[#allocation3 + $0x18] sm:$0xff]
      %v628 = vld [vmem:[#allocation3 + $0x20] sm:$0xff]
      %v629 = vld [vmem:[#allocation3 + $0x28] sm:$0xff]
      %v630 = vld [vmem:[#allocation3 + $0x30] sm:$0xff]
      %v631 = vld [vmem:[#allocation3 + $0x38] sm:$0xff]
      %v632 = vld [vmem:[#allocation3 + $0x40] sm:$0xff]
      %v633 = vld [vmem:[#allocation3 + $0x48] sm:$0xff]
      %v634 = vld [vmem:[#allocation3 + $0x50] sm:$0xff]
      %v635 = vld [vmem:[#allocation3 + $0x58] sm:$0xff]
      %v636 = vld [vmem:[#allocation3 + $0x60] sm:$0xff]
      %v637 = vld [vmem:[#allocation3 + $0x68] sm:$0xff]
      %v638 = vld [vmem:[#allocation3 + $0x70] sm:$0xff]
      %v639 = vld [vmem:[#allocation3 + $0x78] sm:$0xff]
      %v640 = vmul.f32 %v448, 1.442695
      %v641 = vpow.pop %v640
      %v642 = vmul.f32 %v449, 1.442695
      %v643 = vpow.pop %v642
      %v644 = vmul.f32 %v450, 1.442695
      %v645 = vpow.pop %v644
      %v646 = vmul.f32 %v451, 1.442695
      %v647 = vpow.pop %v646
      %v648 = vmul.f32 %v452, 1.442695
      %v649 = vpow.pop %v648
      %v650 = vmul.f32 %v453, 1.442695
      %v651 = vpow.pop %v650
      %v652 = vmul.f32 %v454, 1.442695
      %v653 = vpow.pop %v652
      %v654 = vmul.f32 %v455, 1.442695
      %v655 = vpow.pop %v654
      %v656 = vmul.f32 %v456, 1.442695
      %v657 = vpow.pop %v656
      %v658 = vmul.f32 %v457, 1.442695
      %v659 = vpow.pop %v658
      %v660 = vmul.f32 %v458, 1.442695
      %v661 = vpow.pop %v660
      %v662 = vmul.f32 %v459, 1.442695
      %v663 = vpow.pop %v662
      %v664 = vmul.f32 %v460, 1.442695
      %v665 = vpow.pop %v664
      %v666 = vmul.f32 %v461, 1.442695
      %v667 = vpow.pop %v666
      %v668 = vmul.f32 %v462, 1.442695
      %v669 = vpow.pop %v668
      %v670 = vmul.f32 %v463, 1.442695
      %v671 = vpow.pop %v670
      %v672 = vmul.f32 %v641, %v624
      %v673 = vmul.f32 %v643, %v625
      %v674 = vmul.f32 %v645, %v626
      %v675 = vmul.f32 %v647, %v627
      %v676 = vmul.f32 %v649, %v628
      %v677 = vmul.f32 %v651, %v629
      %v678 = vmul.f32 %v653, %v630
      %v679 = vmul.f32 %v655, %v631
      %v680 = vmul.f32 %v657, %v632
      %v681 = vmul.f32 %v659, %v633
      %v682 = vmul.f32 %v661, %v634
      %v683 = vmul.f32 %v663, %v635
      %v684 = vmul.f32 %v665, %v636
      %v685 = vmul.f32 %v667, %v637
      %v686 = vmul.f32 %v669, %v638
      %v687 = vmul.f32 %v671, %v639
      %v688 = vadd.f32 %v672, %v593
      %v689 = vadd.f32 %v673, %v595
      %v690 = vadd.f32 %v674, %v597
      %v691 = vadd.f32 %v675, %v599
      %v692 = vadd.f32 %v676, %v601
      %v693 = vadd.f32 %v677, %v603
      %v694 = vadd.f32 %v678, %v605
      %v695 = vadd.f32 %v679, %v607
      %v696 = vadd.f32 %v680, %v609
      %v697 = vadd.f32 %v681, %v611
      %v698 = vadd.f32 %v682, %v613
      %v699 = vadd.f32 %v683, %v615
      %v700 = vadd.f32 %v684, %v617
      %v701 = vadd.f32 %v685, %v619
      %v702 = vadd.f32 %v686, %v621
      %v703 = vadd.f32 %v687, %v623
      %v704 = vld [vmem:[%s280] sm:$0xff]
      %v705 = vld [vmem:[%s280 + $0x8] sm:$0xff]
      %v706 = vld [vmem:[%s280 + $0x10] sm:$0xff]
      %v707 = vld [vmem:[%s280 + $0x18] sm:$0xff]
      %v708 = vld [vmem:[%s280 + $0x20] sm:$0xff]
      %v709 = vld [vmem:[%s280 + $0x28] sm:$0xff]
      %v710 = vld [vmem:[%s280 + $0x30] sm:$0xff]
      %v711 = vld [vmem:[%s280 + $0x38] sm:$0xff]
      %v712 = vld [vmem:[%s280 + $0x40] sm:$0xff]
      %v713 = vld [vmem:[%s280 + $0x48] sm:$0xff]
      %v714 = vld [vmem:[%s280 + $0x50] sm:$0xff]
      %v715 = vld [vmem:[%s280 + $0x58] sm:$0xff]
      %v716 = vld [vmem:[%s280 + $0x60] sm:$0xff]
      %v717 = vld [vmem:[%s280 + $0x68] sm:$0xff]
      %v718 = vld [vmem:[%s280 + $0x70] sm:$0xff]
      %v719 = vld [vmem:[%s280 + $0x78] sm:$0xff]
      %721 = vset.pattern.permute.xlu0 0
      %722 = vperm.xlu0 %721, %v672
      %v723 = vpop.permute.xlu0 %722
      %726 = vset.pattern.permute.xlu0 0
      %727 = vperm.xlu0 %726, %v673
      %v728 = vpop.permute.xlu0 %727
      %731 = vset.pattern.permute.xlu0 0
      %732 = vperm.xlu0 %731, %v674
      %v733 = vpop.permute.xlu0 %732
      %736 = vset.pattern.permute.xlu0 0
      %737 = vperm.xlu0 %736, %v675
      %v738 = vpop.permute.xlu0 %737
      %741 = vset.pattern.permute.xlu0 0
      %742 = vperm.xlu0 %741, %v676
      %v743 = vpop.permute.xlu0 %742
      %746 = vset.pattern.permute.xlu0 0
      %747 = vperm.xlu0 %746, %v677
      %v748 = vpop.permute.xlu0 %747
      %751 = vset.pattern.permute.xlu0 0
      %752 = vperm.xlu0 %751, %v678
      %v753 = vpop.permute.xlu0 %752
      %756 = vset.pattern.permute.xlu0 0
      %757 = vperm.xlu0 %756, %v679
      %v758 = vpop.permute.xlu0 %757
      %761 = vset.pattern.permute.xlu0 0
      %762 = vperm.xlu0 %761, %v680
      %v763 = vpop.permute.xlu0 %762
      %766 = vset.pattern.permute.xlu0 0
      %767 = vperm.xlu0 %766, %v681
      %v768 = vpop.permute.xlu0 %767
      %771 = vset.pattern.permute.xlu0 0
      %772 = vperm.xlu0 %771, %v682
      %v773 = vpop.permute.xlu0 %772
      %776 = vset.pattern.permute.xlu0 0
      %777 = vperm.xlu0 %776, %v683
      %v778 = vpop.permute.xlu0 %777
      %781 = vset.pattern.permute.xlu0 0
      %782 = vperm.xlu0 %781, %v684
      %v783 = vpop.permute.xlu0 %782
      %786 = vset.pattern.permute.xlu0 0
      %787 = vperm.xlu0 %786, %v685
      %v788 = vpop.permute.xlu0 %787
      %791 = vset.pattern.permute.xlu0 0
      %792 = vperm.xlu0 %791, %v686
      %v793 = vpop.permute.xlu0 %792
      %796 = vset.pattern.permute.xlu0 0
      %797 = vperm.xlu0 %796, %v687
      %v798 = vpop.permute.xlu0 %797
      %v800 = vmul.f32 %v723, %v704
      %v801 = vmul.f32 %v728, %v705
      %v802 = vmul.f32 %v733, %v706
      %v803 = vmul.f32 %v738, %v707
      %v804 = vmul.f32 %v743, %v708
      %v805 = vmul.f32 %v748, %v709
      %v806 = vmul.f32 %v753, %v710
      %v807 = vmul.f32 %v758, %v711
      %v808 = vmul.f32 %v763, %v712
      %v809 = vmul.f32 %v768, %v713
      %v810 = vmul.f32 %v773, %v714
      %v811 = vmul.f32 %v778, %v715
      %v812 = vmul.f32 %v783, %v716
      %v813 = vmul.f32 %v788, %v717
      %v814 = vmul.f32 %v793, %v718
      %v815 = vmul.f32 %v798, %v719
      %v816 = vld [vmem:[%s266] sm:$0xff]
      %v817 = vld [vmem:[%s266 + $0x8] sm:$0xff]
      %v818 = vld [vmem:[%s266 + $0x10] sm:$0xff]
      %v819 = vld [vmem:[%s266 + $0x18] sm:$0xff]
      %v820 = vld [vmem:[%s266 + $0x20] sm:$0xff]
      %v821 = vld [vmem:[%s266 + $0x28] sm:$0xff]
      %v822 = vld [vmem:[%s266 + $0x30] sm:$0xff]
      %v823 = vld [vmem:[%s266 + $0x38] sm:$0xff]
      %v824 = vld [vmem:[%s266 + $0x40] sm:$0xff]
      %v825 = vld [vmem:[%s266 + $0x48] sm:$0xff]
      %v826 = vld [vmem:[%s266 + $0x50] sm:$0xff]
      %v827 = vld [vmem:[%s266 + $0x58] sm:$0xff]
      %v828 = vld [vmem:[%s266 + $0x60] sm:$0xff]
      %v829 = vld [vmem:[%s266 + $0x68] sm:$0xff]
      %v830 = vld [vmem:[%s266 + $0x70] sm:$0xff]
      %v831 = vld [vmem:[%s266 + $0x78] sm:$0xff]
      %832 = vmatpush.msra.mxu0 %v831
      %833 = vmatpush.msra.mxu0 %v830
      %834 = vmatpush.msra.mxu0 %v829
      %835 = vmatpush.msra.mxu0 %v828
      %836 = vmatpush.msra.mxu0 %v827
      %837 = vmatpush.msra.mxu0 %v826
      %838 = vmatpush.msra.mxu0 %v825
      %839 = vmatpush.msra.mxu0 %v824
      %840 = vmatpush.msra.mxu0 %v823
      %841 = vmatpush.msra.mxu0 %v822
      %842 = vmatpush.msra.mxu0 %v821
      %843 = vmatpush.msra.mxu0 %v820
      %844 = vmatpush.msra.mxu0 %v819
      %845 = vmatpush.msra.mxu0 %v818
      %846 = vmatpush.msra.mxu0 %v817
      %847 = vmatpush.msra.mxu0 %v816
      %848 = vmatmul.f32.gmra.mxu0 %v561
      %v849 = vpop.f32.mrf.mxu0
      %v850 = vadd.f32 %v800, %v849
      %851 = vmatmul.f32.gmra.mxu0 %v563
      %v852 = vpop.f32.mrf.mxu0
      %v853 = vadd.f32 %v801, %v852
      %854 = vmatmul.f32.gmra.mxu0 %v565
      %v855 = vpop.f32.mrf.mxu0
      %v856 = vadd.f32 %v802, %v855
      %857 = vmatmul.f32.gmra.mxu0 %v567
      %v858 = vpop.f32.mrf.mxu0
      %v859 = vadd.f32 %v803, %v858
      %860 = vmatmul.f32.gmra.mxu0 %v569
      %v861 = vpop.f32.mrf.mxu0
      %v862 = vadd.f32 %v804, %v861
      %863 = vmatmul.f32.gmra.mxu0 %v571
      %v864 = vpop.f32.mrf.mxu0
      %v865 = vadd.f32 %v805, %v864
      %866 = vmatmul.f32.gmra.mxu0 %v573
      %v867 = vpop.f32.mrf.mxu0
      %v868 = vadd.f32 %v806, %v867
      %869 = vmatmul.f32.gmra.mxu0 %v575
      %v870 = vpop.f32.mrf.mxu0
      %v871 = vadd.f32 %v807, %v870
      %872 = vmatmul.f32.gmra.mxu0 %v577
      %v873 = vpop.f32.mrf.mxu0
      %v874 = vadd.f32 %v808, %v873
      %875 = vmatmul.f32.gmra.mxu0 %v579
      %v876 = vpop.f32.mrf.mxu0
      %v877 = vadd.f32 %v809, %v876
      %878 = vmatmul.f32.gmra.mxu0 %v581
      %v879 = vpop.f32.mrf.mxu0
      %v880 = vadd.f32 %v810, %v879
      %881 = vmatmul.f32.gmra.mxu0 %v583
      %v882 = vpop.f32.mrf.mxu0
      %v883 = vadd.f32 %v811, %v882
      %884 = vmatmul.f32.gmra.mxu0 %v585
      %v885 = vpop.f32.mrf.mxu0
      %v886 = vadd.f32 %v812, %v885
      %887 = vmatmul.f32.gmra.mxu0 %v587
      %v888 = vpop.f32.mrf.mxu0
      %v889 = vadd.f32 %v813, %v888
      %890 = vmatmul.f32.gmra.mxu0 %v589
      %v891 = vpop.f32.mrf.mxu0
      %v892 = vadd.f32 %v814, %v891
      %893 = vmatmul.f32.gmra.mxu0 %v591
      %v894 = vpop.f32.mrf.mxu0
      %v895 = vadd.f32 %v815, %v894
      %896 = vdwg.mxu0
      %v897 = vrcp.pop %v688
      %v898 = vmul.f32 %v688, %v897
      %v899 = vsub.f32 1.0, %v898
      %v900 = vmul.f32 %v897, %v899
      %v901 = vadd.f32 %v897, %v900
      %vm902 = vweird.f32 %v688
      %vm903 = vweird.f32 %v897
      %vm904 = vmor %vm902, %vm903
      %v905 = vsel %vm904, %v897, %v901
      %v906 = vand.u32 2147483647, %v688
      %vm907 = vcmp.eq.f32.partialorder %v906, 8.507059e+37
      %v908 = vand.u32 %v688, 2147483648
      %v909 = vor.u32 1.1754944e-38, %v908
      %v910 = vsel %vm907, %v909, %v905
      %v911 = vmul.f32 1.0, %v910
      %v912 = vrcp.pop %v689
      %v913 = vmul.f32 %v689, %v912
      %v914 = vsub.f32 1.0, %v913
      %v915 = vmul.f32 %v912, %v914
      %v916 = vadd.f32 %v912, %v915
      %vm917 = vweird.f32 %v689
      %vm918 = vweird.f32 %v912
      %vm919 = vmor %vm917, %vm918
      %v920 = vsel %vm919, %v912, %v916
      %v921 = vand.u32 2147483647, %v689
      %vm922 = vcmp.eq.f32.partialorder %v921, 8.507059e+37
      %v923 = vand.u32 %v689, 2147483648
      %v924 = vor.u32 1.1754944e-38, %v923
      %v925 = vsel %vm922, %v924, %v920
      %v926 = vmul.f32 1.0, %v925
      %v927 = vrcp.pop %v690
      %v928 = vmul.f32 %v690, %v927
      %v929 = vsub.f32 1.0, %v928
      %v930 = vmul.f32 %v927, %v929
      %v931 = vadd.f32 %v927, %v930
      %vm932 = vweird.f32 %v690
      %vm933 = vweird.f32 %v927
      %vm934 = vmor %vm932, %vm933
      %v935 = vsel %vm934, %v927, %v931
      %v936 = vand.u32 2147483647, %v690
      %vm937 = vcmp.eq.f32.partialorder %v936, 8.507059e+37
      %v938 = vand.u32 %v690, 2147483648
      %v939 = vor.u32 1.1754944e-38, %v938
      %v940 = vsel %vm937, %v939, %v935
      %v941 = vmul.f32 1.0, %v940
      %v942 = vrcp.pop %v691
      %v943 = vmul.f32 %v691, %v942
      %v944 = vsub.f32 1.0, %v943
      %v945 = vmul.f32 %v942, %v944
      %v946 = vadd.f32 %v942, %v945
      %vm947 = vweird.f32 %v691
      %vm948 = vweird.f32 %v942
      %vm949 = vmor %vm947, %vm948
      %v950 = vsel %vm949, %v942, %v946
      %v951 = vand.u32 2147483647, %v691
      %vm952 = vcmp.eq.f32.partialorder %v951, 8.507059e+37
      %v953 = vand.u32 %v691, 2147483648
      %v954 = vor.u32 1.1754944e-38, %v953
      %v955 = vsel %vm952, %v954, %v950
      %v956 = vmul.f32 1.0, %v955
      %v957 = vrcp.pop %v692
      %v958 = vmul.f32 %v692, %v957
      %v959 = vsub.f32 1.0, %v958
      %v960 = vmul.f32 %v957, %v959
      %v961 = vadd.f32 %v957, %v960
      %vm962 = vweird.f32 %v692
      %vm963 = vweird.f32 %v957
      %vm964 = vmor %vm962, %vm963
      %v965 = vsel %vm964, %v957, %v961
      %v966 = vand.u32 2147483647, %v692
      %vm967 = vcmp.eq.f32.partialorder %v966, 8.507059e+37
      %v968 = vand.u32 %v692, 2147483648
      %v969 = vor.u32 1.1754944e-38, %v968
      %v970 = vsel %vm967, %v969, %v965
      %v971 = vmul.f32 1.0, %v970
      %v972 = vrcp.pop %v693
      %v973 = vmul.f32 %v693, %v972
      %v974 = vsub.f32 1.0, %v973
      %v975 = vmul.f32 %v972, %v974
      %v976 = vadd.f32 %v972, %v975
      %vm977 = vweird.f32 %v693
      %vm978 = vweird.f32 %v972
      %vm979 = vmor %vm977, %vm978
      %v980 = vsel %vm979, %v972, %v976
      %v981 = vand.u32 2147483647, %v693
      %vm982 = vcmp.eq.f32.partialorder %v981, 8.507059e+37
      %v983 = vand.u32 %v693, 2147483648
      %v984 = vor.u32 1.1754944e-38, %v983
      %v985 = vsel %vm982, %v984, %v980
      %v986 = vmul.f32 1.0, %v985
      %v987 = vrcp.pop %v694
      %v988 = vmul.f32 %v694, %v987
      %v989 = vsub.f32 1.0, %v988
      %v990 = vmul.f32 %v987, %v989
      %v991 = vadd.f32 %v987, %v990
      %vm992 = vweird.f32 %v694
      %vm993 = vweird.f32 %v987
      %vm994 = vmor %vm992, %vm993
      %v995 = vsel %vm994, %v987, %v991
      %v996 = vand.u32 2147483647, %v694
      %vm997 = vcmp.eq.f32.partialorder %v996, 8.507059e+37
      %v998 = vand.u32 %v694, 2147483648
      %v999 = vor.u32 1.1754944e-38, %v998
      %v1000 = vsel %vm997, %v999, %v995
      %v1001 = vmul.f32 1.0, %v1000
      %v1002 = vrcp.pop %v695
      %v1003 = vmul.f32 %v695, %v1002
      %v1004 = vsub.f32 1.0, %v1003
      %v1005 = vmul.f32 %v1002, %v1004
      %v1006 = vadd.f32 %v1002, %v1005
      %vm1007 = vweird.f32 %v695
      %vm1008 = vweird.f32 %v1002
      %vm1009 = vmor %vm1007, %vm1008
      %v1010 = vsel %vm1009, %v1002, %v1006
      %v1011 = vand.u32 2147483647, %v695
      %vm1012 = vcmp.eq.f32.partialorder %v1011, 8.507059e+37
      %v1013 = vand.u32 %v695, 2147483648
      %v1014 = vor.u32 1.1754944e-38, %v1013
      %v1015 = vsel %vm1012, %v1014, %v1010
      %v1016 = vmul.f32 1.0, %v1015
      %v1017 = vrcp.pop %v696
      %v1018 = vmul.f32 %v696, %v1017
      %v1019 = vsub.f32 1.0, %v1018
      %v1020 = vmul.f32 %v1017, %v1019
      %v1021 = vadd.f32 %v1017, %v1020
      %vm1022 = vweird.f32 %v696
      %vm1023 = vweird.f32 %v1017
      %vm1024 = vmor %vm1022, %vm1023
      %v1025 = vsel %vm1024, %v1017, %v1021
      %v1026 = vand.u32 2147483647, %v696
      %vm1027 = vcmp.eq.f32.partialorder %v1026, 8.507059e+37
      %v1028 = vand.u32 %v696, 2147483648
      %v1029 = vor.u32 1.1754944e-38, %v1028
      %v1030 = vsel %vm1027, %v1029, %v1025
      %v1031 = vmul.f32 1.0, %v1030
      %v1032 = vrcp.pop %v697
      %v1033 = vmul.f32 %v697, %v1032
      %v1034 = vsub.f32 1.0, %v1033
      %v1035 = vmul.f32 %v1032, %v1034
      %v1036 = vadd.f32 %v1032, %v1035
      %vm1037 = vweird.f32 %v697
      %vm1038 = vweird.f32 %v1032
      %vm1039 = vmor %vm1037, %vm1038
      %v1040 = vsel %vm1039, %v1032, %v1036
      %v1041 = vand.u32 2147483647, %v697
      %vm1042 = vcmp.eq.f32.partialorder %v1041, 8.507059e+37
      %v1043 = vand.u32 %v697, 2147483648
      %v1044 = vor.u32 1.1754944e-38, %v1043
      %v1045 = vsel %vm1042, %v1044, %v1040
      %v1046 = vmul.f32 1.0, %v1045
      %v1047 = vrcp.pop %v698
      %v1048 = vmul.f32 %v698, %v1047
      %v1049 = vsub.f32 1.0, %v1048
      %v1050 = vmul.f32 %v1047, %v1049
      %v1051 = vadd.f32 %v1047, %v1050
      %vm1052 = vweird.f32 %v698
      %vm1053 = vweird.f32 %v1047
      %vm1054 = vmor %vm1052, %vm1053
      %v1055 = vsel %vm1054, %v1047, %v1051
      %v1056 = vand.u32 2147483647, %v698
      %vm1057 = vcmp.eq.f32.partialorder %v1056, 8.507059e+37
      %v1058 = vand.u32 %v698, 2147483648
      %v1059 = vor.u32 1.1754944e-38, %v1058
      %v1060 = vsel %vm1057, %v1059, %v1055
      %v1061 = vmul.f32 1.0, %v1060
      %v1062 = vrcp.pop %v699
      %v1063 = vmul.f32 %v699, %v1062
      %v1064 = vsub.f32 1.0, %v1063
      %v1065 = vmul.f32 %v1062, %v1064
      %v1066 = vadd.f32 %v1062, %v1065
      %vm1067 = vweird.f32 %v699
      %vm1068 = vweird.f32 %v1062
      %vm1069 = vmor %vm1067, %vm1068
      %v1070 = vsel %vm1069, %v1062, %v1066
      %v1071 = vand.u32 2147483647, %v699
      %vm1072 = vcmp.eq.f32.partialorder %v1071, 8.507059e+37
      %v1073 = vand.u32 %v699, 2147483648
      %v1074 = vor.u32 1.1754944e-38, %v1073
      %v1075 = vsel %vm1072, %v1074, %v1070
      %v1076 = vmul.f32 1.0, %v1075
      %v1077 = vrcp.pop %v700
      %v1078 = vmul.f32 %v700, %v1077
      %v1079 = vsub.f32 1.0, %v1078
      %v1080 = vmul.f32 %v1077, %v1079
      %v1081 = vadd.f32 %v1077, %v1080
      %vm1082 = vweird.f32 %v700
      %vm1083 = vweird.f32 %v1077
      %vm1084 = vmor %vm1082, %vm1083
      %v1085 = vsel %vm1084, %v1077, %v1081
      %v1086 = vand.u32 2147483647, %v700
      %vm1087 = vcmp.eq.f32.partialorder %v1086, 8.507059e+37
      %v1088 = vand.u32 %v700, 2147483648
      %v1089 = vor.u32 1.1754944e-38, %v1088
      %v1090 = vsel %vm1087, %v1089, %v1085
      %v1091 = vmul.f32 1.0, %v1090
      %v1092 = vrcp.pop %v701
      %v1093 = vmul.f32 %v701, %v1092
      %v1094 = vsub.f32 1.0, %v1093
      %v1095 = vmul.f32 %v1092, %v1094
      %v1096 = vadd.f32 %v1092, %v1095
      %vm1097 = vweird.f32 %v701
      %vm1098 = vweird.f32 %v1092
      %vm1099 = vmor %vm1097, %vm1098
      %v1100 = vsel %vm1099, %v1092, %v1096
      %v1101 = vand.u32 2147483647, %v701
      %vm1102 = vcmp.eq.f32.partialorder %v1101, 8.507059e+37
      %v1103 = vand.u32 %v701, 2147483648
      %v1104 = vor.u32 1.1754944e-38, %v1103
      %v1105 = vsel %vm1102, %v1104, %v1100
      %v1106 = vmul.f32 1.0, %v1105
      %v1107 = vrcp.pop %v702
      %v1108 = vmul.f32 %v702, %v1107
      %v1109 = vsub.f32 1.0, %v1108
      %v1110 = vmul.f32 %v1107, %v1109
      %v1111 = vadd.f32 %v1107, %v1110
      %vm1112 = vweird.f32 %v702
      %vm1113 = vweird.f32 %v1107
      %vm1114 = vmor %vm1112, %vm1113
      %v1115 = vsel %vm1114, %v1107, %v1111
      %v1116 = vand.u32 2147483647, %v702
      %vm1117 = vcmp.eq.f32.partialorder %v1116, 8.507059e+37
      %v1118 = vand.u32 %v702, 2147483648
      %v1119 = vor.u32 1.1754944e-38, %v1118
      %v1120 = vsel %vm1117, %v1119, %v1115
      %v1121 = vmul.f32 1.0, %v1120
      %v1122 = vrcp.pop %v703
      %v1123 = vmul.f32 %v703, %v1122
      %v1124 = vsub.f32 1.0, %v1123
      %v1125 = vmul.f32 %v1122, %v1124
      %v1126 = vadd.f32 %v1122, %v1125
      %vm1127 = vweird.f32 %v703
      %vm1128 = vweird.f32 %v1122
      %vm1129 = vmor %vm1127, %vm1128
      %v1130 = vsel %vm1129, %v1122, %v1126
      %v1131 = vand.u32 2147483647, %v703
      %vm1132 = vcmp.eq.f32.partialorder %v1131, 8.507059e+37
      %v1133 = vand.u32 %v703, 2147483648
      %v1134 = vor.u32 1.1754944e-38, %v1133
      %v1135 = vsel %vm1132, %v1134, %v1130
      %v1136 = vmul.f32 1.0, %v1135
      %1138 = vset.pattern.permute.xlu0 0
      %1139 = vperm.xlu0 %1138, %v911
      %v1140 = vpop.permute.xlu0 %1139
      %1143 = vset.pattern.permute.xlu0 0
      %1144 = vperm.xlu0 %1143, %v926
      %v1145 = vpop.permute.xlu0 %1144
      %1148 = vset.pattern.permute.xlu0 0
      %1149 = vperm.xlu0 %1148, %v941
      %v1150 = vpop.permute.xlu0 %1149
      %1153 = vset.pattern.permute.xlu0 0
      %1154 = vperm.xlu0 %1153, %v956
      %v1155 = vpop.permute.xlu0 %1154
      %1158 = vset.pattern.permute.xlu0 0
      %1159 = vperm.xlu0 %1158, %v971
      %v1160 = vpop.permute.xlu0 %1159
      %1163 = vset.pattern.permute.xlu0 0
      %1164 = vperm.xlu0 %1163, %v986
      %v1165 = vpop.permute.xlu0 %1164
      %1168 = vset.pattern.permute.xlu0 0
      %1169 = vperm.xlu0 %1168, %v1001
      %v1170 = vpop.permute.xlu0 %1169
      %1173 = vset.pattern.permute.xlu0 0
      %1174 = vperm.xlu0 %1173, %v1016
      %v1175 = vpop.permute.xlu0 %1174
      %1178 = vset.pattern.permute.xlu0 0
      %1179 = vperm.xlu0 %1178, %v1031
      %v1180 = vpop.permute.xlu0 %1179
      %1183 = vset.pattern.permute.xlu0 0
      %1184 = vperm.xlu0 %1183, %v1046
      %v1185 = vpop.permute.xlu0 %1184
      %1188 = vset.pattern.permute.xlu0 0
      %1189 = vperm.xlu0 %1188, %v1061
      %v1190 = vpop.permute.xlu0 %1189
      %1193 = vset.pattern.permute.xlu0 0
      %1194 = vperm.xlu0 %1193, %v1076
      %v1195 = vpop.permute.xlu0 %1194
      %1198 = vset.pattern.permute.xlu0 0
      %1199 = vperm.xlu0 %1198, %v1091
      %v1200 = vpop.permute.xlu0 %1199
      %1203 = vset.pattern.permute.xlu0 0
      %1204 = vperm.xlu0 %1203, %v1106
      %v1205 = vpop.permute.xlu0 %1204
      %1208 = vset.pattern.permute.xlu0 0
      %1209 = vperm.xlu0 %1208, %v1121
      %v1210 = vpop.permute.xlu0 %1209
      %1213 = vset.pattern.permute.xlu0 0
      %1214 = vperm.xlu0 %1213, %v1136
      %v1215 = vpop.permute.xlu0 %1214
      %v1217 = vmul.f32 %v850, %v1140
      %v1218 = vmul.f32 %v853, %v1145
      %v1219 = vmul.f32 %v856, %v1150
      %v1220 = vmul.f32 %v859, %v1155
      %v1221 = vmul.f32 %v862, %v1160
      %v1222 = vmul.f32 %v865, %v1165
      %v1223 = vmul.f32 %v868, %v1170
      %v1224 = vmul.f32 %v871, %v1175
      %v1225 = vmul.f32 %v874, %v1180
      %v1226 = vmul.f32 %v877, %v1185
      %v1227 = vmul.f32 %v880, %v1190
      %v1228 = vmul.f32 %v883, %v1195
      %v1229 = vmul.f32 %v886, %v1200
      %v1230 = vmul.f32 %v889, %v1205
      %v1231 = vmul.f32 %v892, %v1210
      %v1232 = vmul.f32 %v895, %v1215
      %vm1233 = vcmask 523264
      %1234 = vst.msk [vmem:[%s280] sm:$0xff] %vm1233, %v1217
      %1235 = vst.msk [vmem:[%s280 + $0x8] sm:$0xff] %vm1233, %v1218
      %1236 = vst.msk [vmem:[%s280 + $0x10] sm:$0xff] %vm1233, %v1219
      %1237 = vst.msk [vmem:[%s280 + $0x18] sm:$0xff] %vm1233, %v1220
      %1238 = vst.msk [vmem:[%s280 + $0x20] sm:$0xff] %vm1233, %v1221
      %1239 = vst.msk [vmem:[%s280 + $0x28] sm:$0xff] %vm1233, %v1222
      %1240 = vst.msk [vmem:[%s280 + $0x30] sm:$0xff] %vm1233, %v1223
      %1241 = vst.msk [vmem:[%s280 + $0x38] sm:$0xff] %vm1233, %v1224
      %1242 = vst.msk [vmem:[%s280 + $0x40] sm:$0xff] %vm1233, %v1225
      %1243 = vst.msk [vmem:[%s280 + $0x48] sm:$0xff] %vm1233, %v1226
      %1244 = vst.msk [vmem:[%s280 + $0x50] sm:$0xff] %vm1233, %v1227
      %1245 = vst.msk [vmem:[%s280 + $0x58] sm:$0xff] %vm1233, %v1228
      %1246 = vst.msk [vmem:[%s280 + $0x60] sm:$0xff] %vm1233, %v1229
      %1247 = vst.msk [vmem:[%s280 + $0x68] sm:$0xff] %vm1233, %v1230
      %1248 = vst.msk [vmem:[%s280 + $0x70] sm:$0xff] %vm1233, %v1231
      %1249 = vst.msk [vmem:[%s280 + $0x78] sm:$0xff] %vm1233, %v1232
      %vm1250 = vcmask 7168
      %1251 = vst.msk [vmem:[#allocation2] sm:$0xff] %vm1250, %v400
      %1252 = vst.msk [vmem:[#allocation2 + $0x8] sm:$0xff] %vm1250, %v401
      %1253 = vst.msk [vmem:[#allocation2 + $0x10] sm:$0xff] %vm1250, %v402
      %1254 = vst.msk [vmem:[#allocation2 + $0x18] sm:$0xff] %vm1250, %v403
      %1255 = vst.msk [vmem:[#allocation2 + $0x20] sm:$0xff] %vm1250, %v404
      %1256 = vst.msk [vmem:[#allocation2 + $0x28] sm:$0xff] %vm1250, %v405
      %1257 = vst.msk [vmem:[#allocation2 + $0x30] sm:$0xff] %vm1250, %v406
      %1258 = vst.msk [vmem:[#allocation2 + $0x38] sm:$0xff] %vm1250, %v407
      %1259 = vst.msk [vmem:[#allocation2 + $0x40] sm:$0xff] %vm1250, %v408
      %1260 = vst.msk [vmem:[#allocation2 + $0x48] sm:$0xff] %vm1250, %v409
      %1261 = vst.msk [vmem:[#allocation2 + $0x50] sm:$0xff] %vm1250, %v410
      %1262 = vst.msk [vmem:[#allocation2 + $0x58] sm:$0xff] %vm1250, %v411
      %1263 = vst.msk [vmem:[#allocation2 + $0x60] sm:$0xff] %vm1250, %v412
      %1264 = vst.msk [vmem:[#allocation2 + $0x68] sm:$0xff] %vm1250, %v413
      %1265 = vst.msk [vmem:[#allocation2 + $0x70] sm:$0xff] %vm1250, %v414
      %1266 = vst.msk [vmem:[#allocation2 + $0x78] sm:$0xff] %vm1250, %v415
      %1267 = vst.msk [vmem:[#allocation3] sm:$0xff] %vm1250, %v688
      %1268 = vst.msk [vmem:[#allocation3 + $0x8] sm:$0xff] %vm1250, %v689
      %1269 = vst.msk [vmem:[#allocation3 + $0x10] sm:$0xff] %vm1250, %v690
      %1270 = vst.msk [vmem:[#allocation3 + $0x18] sm:$0xff] %vm1250, %v691
      %1271 = vst.msk [vmem:[#allocation3 + $0x20] sm:$0xff] %vm1250, %v692
      %1272 = vst.msk [vmem:[#allocation3 + $0x28] sm:$0xff] %vm1250, %v693
      %1273 = vst.msk [vmem:[#allocation3 + $0x30] sm:$0xff] %vm1250, %v694
      %1274 = vst.msk [vmem:[#allocation3 + $0x38] sm:$0xff] %vm1250, %v695
      %1275 = vst.msk [vmem:[#allocation3 + $0x40] sm:$0xff] %vm1250, %v696
      %1276 = vst.msk [vmem:[#allocation3 + $0x48] sm:$0xff] %vm1250, %v697
      %1277 = vst.msk [vmem:[#allocation3 + $0x50] sm:$0xff] %vm1250, %v698
      %1278 = vst.msk [vmem:[#allocation3 + $0x58] sm:$0xff] %vm1250, %v699
      %1279 = vst.msk [vmem:[#allocation3 + $0x60] sm:$0xff] %vm1250, %v700
      %1280 = vst.msk [vmem:[#allocation3 + $0x68] sm:$0xff] %vm1250, %v701
      %1281 = vst.msk [vmem:[#allocation3 + $0x70] sm:$0xff] %vm1250, %v702
      %1282 = vst.msk [vmem:[#allocation3 + $0x78] sm:$0xff] %vm1250, %v703
      %s1283 = smul.u32 16, %s21
      %p1284 = scmp.lt.s32.totalorder %s19, 1
      %s1285 = scalar_select %p1284, %s19, 1
      %p1286 = scmp.lt.s32.totalorder %s20, 2
      %s1287 = scalar_select %p1286, %s20, 2
      %p1288 = scmp.lt.s32.totalorder %s1283, 15
      %s1289 = scalar_select %p1288, %s1283, 15
      %s1290 = smul.addr %s1287, 16
      %s1291 = sadd.s32 %s1289, %s1290
      %s1292 = smul.addr %s1285, 48
      %s1293 = sadd.s32 %s1291, %s1292
      %s1294 = smul.addr %s1293, 8
      %s1295 = scalar_lea.vmem %s2, %s1294
      // Predicated region
      $region33: #{online-softmax} parent=27 // pred_check
        %p1296 = pneg %p123
      $region34: #{online-softmax} parent=27 // pred_check_branch
        %1298 = sbr.rel (%p1296) target = $region36
      $region35: #{online-softmax} parent=27 // pred_region
        %s1299 = smul.u32 16, %s21
      $region36: #{online-softmax} parent=27 // pred_fallthru
        _
    $region28: #{online-softmax} parent=5 // pred_fallthru
      _
    %p1300 = scmp.le.s32.totalorder 2, %s8
    // Predicated region
    $region37: #{online-softmax} parent=5 // pred_check
      %p1301 = pneg %p1300
    $region38: #{online-softmax} parent=5 // pred_check_branch
      %1303 = sbr.rel (%p1301) target = $region40
    $region39: #{online-softmax} parent=5 // pred_region
      %s1304 = ssub.s32 %s8, 2
      // Predicated region
      $region41: #{online-softmax} parent=39 // pred_check
        %p1305 = pneg %p129
      $region42: #{online-softmax} parent=39 // pred_check_branch
        %1307 = sbr.rel (%p1305) target = $region44
      $region43: #{online-softmax} parent=39 // pred_region
        %s1308 = smul.u32 16, %s25
        %p1309 = scmp.lt.s32.totalorder %s23, 1
        %s1310 = scalar_select %p1309, %s23, 1
        %p1311 = scmp.lt.s32.totalorder %s24, 2
        %s1312 = scalar_select %p1311, %s24, 2
        %p1313 = scmp.lt.s32.totalorder %s1308, 15
        %s1314 = scalar_select %p1313, %s1308, 15
        %s1315 = smul.addr %s1312, 16
        %s1316 = sadd.s32 %s1314, %s1315
        %s1317 = smul.addr %s1310, 48
        %s1318 = sadd.s32 %s1316, %s1317
        %s1319 = smul.addr %s1318, 8
        %s1320 = scalar_lea.vmem %s2, %s1319
      $region44: #{online-softmax} parent=39 // pred_fallthru
        _
    $region40: #{online-softmax} parent=5 // pred_fallthru
      _
  $region6: #{online-softmax} parent=0 // loop_footer
    %s12 = sadd.s32 1, %s8
  $region7: #{online-softmax} parent=0 // loop_footer_branch
    %7 = sbr.rel target = $region3
  $region8: #{online-softmax} parent=0 // loop_exit
    _

// kernel: online-softmax.1
$region0: #{online-softmax.1}
  #allocation0 [shape = 'u32[]', space=smem, size = 0x4, offset = 0x4, fixed_abs, tag = 'smem constant byte address 0x4 - core index']
  #allocation1 [shape = 'u32[72,128]{1,0:T(1,128)}', space=vmem, size = 0x9000, scoped, tag = 'internal scratch']
  #allocation2 [shape = 'f32[1,128,1]{2,1,0:T(8,128)}', space=vmem, size = 0x10000, scoped, tag = 'scratch operand']
  #allocation3 [shape = 'f32[1,128,1]{2,1,0:T(8,128)}', space=vmem, size = 0x10000, scoped, tag = 'scratch operand']
  %s0 = inlined_call_operand.vmem [shape: f32[2,128,128], index: 0, kind: input, shape index: {}]
  %s1 = inlined_call_operand.vmem [shape: f32[2,128,64], index: 1, kind: input, shape index: {}]
  %s2 = inlined_call_operand.vmem [shape: f32[2,128,64], index: 2, kind: output, shape index: {}]
  %s3 = sld [smem:[#allocation0]]
  $region45: #{online-softmax.1} parent=0
    _
  %s5 = ssub.s32 1, %s3
  %s6 = scalar_select 0, %s5, %s3
  loop: start=0, step=1, limit=4
  $region2: #{online-softmax.1} parent=0 // loop_pre_header
    _
  $region3: #{online-softmax.1} parent=0 // loop_header
    %s8 = sphi 0, %s12
    %p9 = scmp.ge.s32.totalorder %s8, 4
    %s15 = sphi 0, %s34
    %s16 = sphi 0, %s30
    %s17 = sphi 0, %s26
    %s18 = sphi 0, %s15
    %s19 = sphi 0, %s16
    %s20 = sphi 0, %s17
    %s21 = sphi 0, %s18
    %s22 = sphi 0, %s19
    %s23 = sphi 0, %s20
    %s41 = sphi 0, %s43
    %s44 = sphi 0, %s41
    %s45 = sphi 0, %s44
    %s61 = sphi 0, %s45
    %s69 = sphi 0, %s71
    %s72 = sphi 0, %s69
    %s73 = sphi 0, %s72
    %s89 = sphi 0, %s73
    %s97 = sphi 0, %s99
    %s100 = sphi 0, %s97
    %s101 = sphi 0, %s100
    %s117 = sphi 0, %s101
  $region4: #{online-softmax.1} parent=0 // loop_header_branch
    %11 = sbr.rel (%p9) target = $region8
  $region5: #{online-softmax.1} parent=0 // loop_body
    %s13 = ssub.s32 %s8, 1
    %s14 = ssub.s32 %s8, 2
    %s24 = sadd.s32 1, %s17
    %p25 = scmp.ge.s32.totalorder %s24, 1
    %s26 = scalar_select %p25, 0, %s24
    %s27 = sadd.s32 1, %s16
    %s28 = scalar_select %p25, %s27, %s16
    %p29 = scmp.ge.s32.totalorder %s28, 1
    %s30 = scalar_select %p29, 0, %s28
    %s31 = sadd.s32 1, %s15
    %s32 = scalar_select %p29, %s31, %s15
    %p33 = scmp.ge.s32.totalorder %s32, 2
    %s34 = scalar_select %p33, 0, %s32
    %s35 = ssub.s32 %s15, %s34
    %s36 = ssub.s32 %s16, %s30
    %s37 = sor.u32 %s35, %s36
    %s38 = ssub.s32 %s17, %s26
    %s39 = sor.u32 %s37, %s38
    %p40 = scmp.eq.s32.totalorder %s39, 0
    %s42 = sadd.s32 %s41, 1
    %s43 = scalar_select %p40, %s41, %s42
    %p46 = pneg %p40
    %p47 = scmp.eq.s32.totalorder %s8, 1
    %p48 = por %p46, %p47
    %p49 = scmp.ne.s32.totalorder %s41, %s44
    %p50 = scmp.eq.s32.totalorder %s8, 0
    %p51 = por %p49, %p50
    %p52 = scmp.ne.s32.totalorder %s41, %s44
    %p53 = scmp.eq.s32.totalorder %s13, 1
    %p54 = por %p52, %p53
    %p55 = scmp.ne.s32.totalorder %s44, %s45
    %p56 = scmp.eq.s32.totalorder %s13, 0
    %p57 = por %p55, %p56
    %p58 = scmp.ne.s32.totalorder %s44, %s45
    %p59 = scmp.eq.s32.totalorder %s14, 1
    %p60 = por %p58, %p59
    %p62 = scmp.ne.s32.totalorder %s45, %s61
    %p63 = scmp.eq.s32.totalorder %s14, 0
    %p64 = por %p62, %p63
    %s65 = ssub.s32 %s15, %s34
    %s66 = ssub.s32 %s17, %s26
    %s67 = sor.u32 %s65, %s66
    %p68 = scmp.eq.s32.totalorder %s67, 0
    %s70 = sadd.s32 %s69, 1
    %s71 = scalar_select %p68, %s69, %s70
    %p74 = pneg %p68
    %p75 = scmp.eq.s32.totalorder %s8, 1
    %p76 = por %p74, %p75
    %p77 = scmp.ne.s32.totalorder %s69, %s72
    %p78 = scmp.eq.s32.totalorder %s8, 0
    %p79 = por %p77, %p78
    %p80 = scmp.ne.s32.totalorder %s69, %s72
    %p81 = scmp.eq.s32.totalorder %s13, 1
    %p82 = por %p80, %p81
    %p83 = scmp.ne.s32.totalorder %s72, %s73
    %p84 = scmp.eq.s32.totalorder %s13, 0
    %p85 = por %p83, %p84
    %p86 = scmp.ne.s32.totalorder %s72, %s73
    %p87 = scmp.eq.s32.totalorder %s14, 1
    %p88 = por %p86, %p87
    %p90 = scmp.ne.s32.totalorder %s73, %s89
    %p91 = scmp.eq.s32.totalorder %s14, 0
    %p92 = por %p90, %p91
    %s93 = ssub.s32 %s15, %s34
    %s94 = ssub.s32 %s16, %s30
    %s95 = sor.u32 %s93, %s94
    %p96 = scmp.eq.s32.totalorder %s95, 0
    %s98 = sadd.s32 %s97, 1
    %s99 = scalar_select %p96, %s97, %s98
    %p102 = pneg %p96
    %p103 = scmp.eq.s32.totalorder %s8, 1
    %p104 = por %p102, %p103
    %p105 = scmp.ne.s32.totalorder %s97, %s100
    %p106 = scmp.eq.s32.totalorder %s8, 0
    %p107 = por %p105, %p106
    %p108 = scmp.ne.s32.totalorder %s97, %s100
    %p109 = scmp.eq.s32.totalorder %s13, 1
    %p110 = por %p108, %p109
    %p111 = scmp.ne.s32.totalorder %s100, %s101
    %p112 = scmp.eq.s32.totalorder %s13, 0
    %p113 = por %p111, %p112
    %p114 = scmp.ne.s32.totalorder %s100, %s101
    %p115 = scmp.eq.s32.totalorder %s14, 1
    %p116 = por %p114, %p115
    %p118 = scmp.ne.s32.totalorder %s101, %s117
    %p119 = scmp.eq.s32.totalorder %s14, 0
    %p120 = por %p118, %p119
    %p121 = scmp.le.s32.totalorder 1, %s8
    %p122 = scmp.lt.s32.totalorder %s8, 3
    %p123 = pnand %p121, %p122
    %p124 = pneg %p123
    // Predicated region
    $region9: #{online-softmax.1} parent=5 // pred_check
      _
    $region10: #{online-softmax.1} parent=5 // pred_check_branch
      %126 = sbr.rel (%p123) target = $region12
    $region11: #{online-softmax.1} parent=5 // pred_region
      %s127 = ssub.s32 %s8, 1
    $region12: #{online-softmax.1} parent=5 // pred_fallthru
      _
    %p128 = scmp.lt.s32.totalorder %s8, 2
    // Predicated region
    $region13: #{online-softmax.1} parent=5 // pred_check
      %p129 = pneg %p128
    $region14: #{online-softmax.1} parent=5 // pred_check_branch
      %131 = sbr.rel (%p129) target = $region16
    $region15: #{online-softmax.1} parent=5 // pred_region
      // Predicated region
      $region17: #{online-softmax.1} parent=15 // pred_check
        %p132 = pneg %p51
      $region18: #{online-softmax.1} parent=15 // pred_check_branch
        %134 = sbr.rel (%p132) target = $region20
      $region19: #{online-softmax.1} parent=15 // pred_region
        %s135 = smul.u32 16, %s16
        %p136 = scmp.lt.s32.totalorder %s15, 1
        %s137 = scalar_select %p136, %s15, 1
        %p138 = scmp.lt.s32.totalorder %s135, 15
        %s139 = scalar_select %p138, %s135, 15
        %p140 = scmp.lt.s32.totalorder %s17, 0
        %s141 = scalar_select %p140, %s17, 0
        %s142 = sadd.s32 %s141, %s139
        %s143 = smul.addr %s137, 16
        %s144 = sadd.s32 %s142, %s143
        %s145 = smul.addr %s144, 8
        %s146 = scalar_lea.vmem %s0, %s145
        %s147 = smul.u32 16, %s16
      $region20: #{online-softmax.1} parent=15 // pred_fallthru
        _
      // Predicated region
      $region21: #{online-softmax.1} parent=15 // pred_check
        %p148 = pneg %p79
      $region22: #{online-softmax.1} parent=15 // pred_check_branch
        %150 = sbr.rel (%p148) target = $region24
      $region23: #{online-softmax.1} parent=15 // pred_region
        %s151 = smul.u32 16, %s17
        %p152 = scmp.lt.s32.totalorder %s15, 1
        %s153 = scalar_select %p152, %s15, 1
        %p154 = scmp.lt.s32.totalorder %s151, 15
        %s155 = scalar_select %p154, %s151, 15
        %s156 = smul.addr %s153, 16
        %s157 = sadd.s32 %s155, %s156
        %s158 = smul.addr %s157, 8
        %s159 = scalar_lea.vmem %s1, %s158
        %s160 = smul.u32 16, %s17
      $region24: #{online-softmax.1} parent=15 // pred_fallthru
        _
    $region16: #{online-softmax.1} parent=5 // pred_fallthru
      _
    %p161 = scmp.le.s32.totalorder 1, %s8
    %p162 = scmp.lt.s32.totalorder %s8, 3
    %p163 = pnand %p161, %p162
    %p164 = pneg %p163
    // Predicated region
    $region25: #{online-softmax.1} parent=5 // pred_check
      _
    $region26: #{online-softmax.1} parent=5 // pred_check_branch
      %166 = sbr.rel (%p163) target = $region28
    $region27: #{online-softmax.1} parent=5 // pred_region
      %s167 = ssub.s32 %s8, 1
      %s168 = smul.u32 16, %s19
      %p169 = scmp.lt.s32.totalorder %s18, 1
      %s170 = scalar_select %p169, %s18, 1
      %p171 = scmp.lt.s32.totalorder %s168, 15
      %s172 = scalar_select %p171, %s168, 15
      %p173 = scmp.lt.s32.totalorder %s20, 0
      %s174 = scalar_select %p173, %s20, 0
      %s175 = sadd.s32 %s174, %s172
      %s176 = smul.addr %s170, 16
      %s177 = sadd.s32 %s175, %s176
      %s178 = smul.addr %s177, 8
      %s179 = scalar_lea.vmem %s0, %s178
      %p180 = pneg %p57
      %p181 = pneg %p54
      %s182 = smul.u32 16, %s20
      %p183 = scmp.lt.s32.totalorder %s18, 1
      %s184 = scalar_select %p183, %s18, 1
      %p185 = scmp.lt.s32.totalorder %s182, 15
      %s186 = scalar_select %p185, %s182, 15
      %s187 = smul.addr %s184, 16
      %s188 = sadd.s32 %s186, %s187
      %s189 = smul.addr %s188, 8
      %s190 = scalar_lea.vmem %s1, %s189
      %p191 = pneg %p85
      %p192 = pneg %p82
      %p193 = pneg %p113
      %p194 = pneg %p110
      %s195 = smul.u32 16, %s19
      %p196 = scmp.lt.s32.totalorder %s18, 1
      %s197 = scalar_select %p196, %s18, 1
      %p198 = scmp.lt.s32.totalorder %s195, 15
      %s199 = scalar_select %p198, %s195, 15
      %s200 = smul.addr %s197, 16
      %s201 = sadd.s32 %s199, %s200
      %s202 = smul.addr %s201, 8
      %s203 = scalar_lea.vmem %s2, %s202
      %s204 = smul.u32 16, %s19
      %p205 = scmp.lt.s32.totalorder %s18, 1
      %s206 = scalar_select %p205, %s18, 1
      %p207 = scmp.lt.s32.totalorder %s204, 15
      %s208 = scalar_select %p207, %s204, 15
      %p209 = scmp.lt.s32.totalorder %s20, 0
      %s210 = scalar_select %p209, %s20, 0
      %s211 = sadd.s32 %s210, %s208
      %s212 = smul.addr %s206, 16
      %s213 = sadd.s32 %s211, %s212
      %s214 = smul.addr %s213, 8
      %s215 = scalar_lea.vmem %s0, %s214
      %s216 = smul.u32 16, %s19
      %s217 = smul.u32 16, %s20
      %p218 = scmp.lt.s32.totalorder %s18, 1
      %s219 = scalar_select %p218, %s18, 1
      %p220 = scmp.lt.s32.totalorder %s217, 15
      %s221 = scalar_select %p220, %s217, 15
      %s222 = smul.addr %s219, 16
      %s223 = sadd.s32 %s221, %s222
      %s224 = smul.addr %s223, 8
      %s225 = scalar_lea.vmem %s1, %s224
      %s226 = smul.u32 16, %s20
      %s227 = smul.u32 16, %s19
      %p228 = scmp.lt.s32.totalorder %s18, 1
      %s229 = scalar_select %p228, %s18, 1
      %p230 = scmp.lt.s32.totalorder %s227, 15
      %s231 = scalar_select %p230, %s227, 15
      %s232 = smul.addr %s229, 16
      %s233 = sadd.s32 %s231, %s232
      %s234 = smul.addr %s233, 8
      %s235 = scalar_lea.vmem %s2, %s234
      %s236 = smul.u32 16, %s19
      %p237 = scmp.eq.s32.totalorder %s20, 0
      // Predicated region
      $region29: #{online-softmax.1} parent=27 // pred_check
        %p238 = pneg %p237
      $region30: #{online-softmax.1} parent=27 // pred_check_branch
        %240 = sbr.rel (%p238) target = $region32
      $region31: #{online-softmax.1} parent=27 // pred_region
        %vm241 = vcmask 523264
        %242 = vst.msk [vmem:[%s235] sm:$0xff] %vm241, 0.0
        %243 = vst.msk [vmem:[%s235 + $0x8] sm:$0xff] %vm241, 0.0
        %244 = vst.msk [vmem:[%s235 + $0x10] sm:$0xff] %vm241, 0.0
        %245 = vst.msk [vmem:[%s235 + $0x18] sm:$0xff] %vm241, 0.0
        %246 = vst.msk [vmem:[%s235 + $0x20] sm:$0xff] %vm241, 0.0
        %247 = vst.msk [vmem:[%s235 + $0x28] sm:$0xff] %vm241, 0.0
        %248 = vst.msk [vmem:[%s235 + $0x30] sm:$0xff] %vm241, 0.0
        %249 = vst.msk [vmem:[%s235 + $0x38] sm:$0xff] %vm241, 0.0
        %250 = vst.msk [vmem:[%s235 + $0x40] sm:$0xff] %vm241, 0.0
        %251 = vst.msk [vmem:[%s235 + $0x48] sm:$0xff] %vm241, 0.0
        %252 = vst.msk [vmem:[%s235 + $0x50] sm:$0xff] %vm241, 0.0
        %253 = vst.msk [vmem:[%s235 + $0x58] sm:$0xff] %vm241, 0.0
        %254 = vst.msk [vmem:[%s235 + $0x60] sm:$0xff] %vm241, 0.0
        %255 = vst.msk [vmem:[%s235 + $0x68] sm:$0xff] %vm241, 0.0
        %256 = vst.msk [vmem:[%s235 + $0x70] sm:$0xff] %vm241, 0.0
        %257 = vst.msk [vmem:[%s235 + $0x78] sm:$0xff] %vm241, 0.0
        %vm258 = vcmask 7168
        %259 = vst.msk [vmem:[#allocation2] sm:$0xff] %vm258, -inf
        %260 = vst.msk [vmem:[#allocation2 + $0x8] sm:$0xff] %vm258, -inf
        %261 = vst.msk [vmem:[#allocation2 + $0x10] sm:$0xff] %vm258, -inf
        %262 = vst.msk [vmem:[#allocation2 + $0x18] sm:$0xff] %vm258, -inf
        %263 = vst.msk [vmem:[#allocation2 + $0x20] sm:$0xff] %vm258, -inf
        %264 = vst.msk [vmem:[#allocation2 + $0x28] sm:$0xff] %vm258, -inf
        %265 = vst.msk [vmem:[#allocation2 + $0x30] sm:$0xff] %vm258, -inf
        %266 = vst.msk [vmem:[#allocation2 + $0x38] sm:$0xff] %vm258, -inf
        %267 = vst.msk [vmem:[#allocation2 + $0x40] sm:$0xff] %vm258, -inf
        %268 = vst.msk [vmem:[#allocation2 + $0x48] sm:$0xff] %vm258, -inf
        %269 = vst.msk [vmem:[#allocation2 + $0x50] sm:$0xff] %vm258, -inf
        %270 = vst.msk [vmem:[#allocation2 + $0x58] sm:$0xff] %vm258, -inf
        %271 = vst.msk [vmem:[#allocation2 + $0x60] sm:$0xff] %vm258, -inf
        %272 = vst.msk [vmem:[#allocation2 + $0x68] sm:$0xff] %vm258, -inf
        %273 = vst.msk [vmem:[#allocation2 + $0x70] sm:$0xff] %vm258, -inf
        %274 = vst.msk [vmem:[#allocation2 + $0x78] sm:$0xff] %vm258, -inf
        %275 = vst.msk [vmem:[#allocation3] sm:$0xff] %vm258, 0.0
        %276 = vst.msk [vmem:[#allocation3 + $0x8] sm:$0xff] %vm258, 0.0
        %277 = vst.msk [vmem:[#allocation3 + $0x10] sm:$0xff] %vm258, 0.0
        %278 = vst.msk [vmem:[#allocation3 + $0x18] sm:$0xff] %vm258, 0.0
        %279 = vst.msk [vmem:[#allocation3 + $0x20] sm:$0xff] %vm258, 0.0
        %280 = vst.msk [vmem:[#allocation3 + $0x28] sm:$0xff] %vm258, 0.0
        %281 = vst.msk [vmem:[#allocation3 + $0x30] sm:$0xff] %vm258, 0.0
        %282 = vst.msk [vmem:[#allocation3 + $0x38] sm:$0xff] %vm258, 0.0
        %283 = vst.msk [vmem:[#allocation3 + $0x40] sm:$0xff] %vm258, 0.0
        %284 = vst.msk [vmem:[#allocation3 + $0x48] sm:$0xff] %vm258, 0.0
        %285 = vst.msk [vmem:[#allocation3 + $0x50] sm:$0xff] %vm258, 0.0
        %286 = vst.msk [vmem:[#allocation3 + $0x58] sm:$0xff] %vm258, 0.0
        %287 = vst.msk [vmem:[#allocation3 + $0x60] sm:$0xff] %vm258, 0.0
        %288 = vst.msk [vmem:[#allocation3 + $0x68] sm:$0xff] %vm258, 0.0
        %289 = vst.msk [vmem:[#allocation3 + $0x70] sm:$0xff] %vm258, 0.0
        %290 = vst.msk [vmem:[#allocation3 + $0x78] sm:$0xff] %vm258, 0.0
      $region32: #{online-softmax.1} parent=27 // pred_fallthru
        _
      %v291 = vld [vmem:[%s215] sm:$0xff]
      %v292 = vld [vmem:[%s215 + $0x8] sm:$0xff]
      %v293 = vld [vmem:[%s215 + $0x10] sm:$0xff]
      %v294 = vld [vmem:[%s215 + $0x18] sm:$0xff]
      %v295 = vld [vmem:[%s215 + $0x20] sm:$0xff]
      %v296 = vld [vmem:[%s215 + $0x28] sm:$0xff]
      %v297 = vld [vmem:[%s215 + $0x30] sm:$0xff]
      %v298 = vld [vmem:[%s215 + $0x38] sm:$0xff]
      %v299 = vld [vmem:[%s215 + $0x40] sm:$0xff]
      %v300 = vld [vmem:[%s215 + $0x48] sm:$0xff]
      %v301 = vld [vmem:[%s215 + $0x50] sm:$0xff]
      %v302 = vld [vmem:[%s215 + $0x58] sm:$0xff]
      %v303 = vld [vmem:[%s215 + $0x60] sm:$0xff]
      %v304 = vld [vmem:[%s215 + $0x68] sm:$0xff]
      %v305 = vld [vmem:[%s215 + $0x70] sm:$0xff]
      %v306 = vld [vmem:[%s215 + $0x78] sm:$0xff]
      %307 = vmax.xlane.f32.xlu0 %v291
      %v308 = vpop.xlane.xlu0 %307
      %309 = vmax.xlane.f32.xlu0 %v292
      %v310 = vpop.xlane.xlu0 %309
      %311 = vmax.xlane.f32.xlu0 %v293
      %v312 = vpop.xlane.xlu0 %311
      %313 = vmax.xlane.f32.xlu0 %v294
      %v314 = vpop.xlane.xlu0 %313
      %315 = vmax.xlane.f32.xlu0 %v295
      %v316 = vpop.xlane.xlu0 %315
      %317 = vmax.xlane.f32.xlu0 %v296
      %v318 = vpop.xlane.xlu0 %317
      %319 = vmax.xlane.f32.xlu0 %v297
      %v320 = vpop.xlane.xlu0 %319
      %321 = vmax.xlane.f32.xlu0 %v298
      %v322 = vpop.xlane.xlu0 %321
      %323 = vmax.xlane.f32.xlu0 %v299
      %v324 = vpop.xlane.xlu0 %323
      %325 = vmax.xlane.f32.xlu0 %v300
      %v326 = vpop.xlane.xlu0 %325
      %327 = vmax.xlane.f32.xlu0 %v301
      %v328 = vpop.xlane.xlu0 %327
      %329 = vmax.xlane.f32.xlu0 %v302
      %v330 = vpop.xlane.xlu0 %329
      %331 = vmax.xlane.f32.xlu0 %v303
      %v332 = vpop.xlane.xlu0 %331
      %333 = vmax.xlane.f32.xlu0 %v304
      %v334 = vpop.xlane.xlu0 %333
      %335 = vmax.xlane.f32.xlu0 %v305
      %v336 = vpop.xlane.xlu0 %335
      %337 = vmax.xlane.f32.xlu0 %v306
      %v338 = vpop.xlane.xlu0 %337
      %v339 = vld [vmem:[#allocation2] sm:$0xff]
      %v340 = vld [vmem:[#allocation2 + $0x8] sm:$0xff]
      %v341 = vld [vmem:[#allocation2 + $0x10] sm:$0xff]
      %v342 = vld [vmem:[#allocation2 + $0x18] sm:$0xff]
      %v343 = vld [vmem:[#allocation2 + $0x20] sm:$0xff]
      %v344 = vld [vmem:[#allocation2 + $0x28] sm:$0xff]
      %v345 = vld [vmem:[#allocation2 + $0x30] sm:$0xff]
      %v346 = vld [vmem:[#allocation2 + $0x38] sm:$0xff]
      %v347 = vld [vmem:[#allocation2 + $0x40] sm:$0xff]
      %v348 = vld [vmem:[#allocation2 + $0x48] sm:$0xff]
      %v349 = vld [vmem:[#allocation2 + $0x50] sm:$0xff]
      %v350 = vld [vmem:[#allocation2 + $0x58] sm:$0xff]
      %v351 = vld [vmem:[#allocation2 + $0x60] sm:$0xff]
      %v352 = vld [vmem:[#allocation2 + $0x68] sm:$0xff]
      %v353 = vld [vmem:[#allocation2 + $0x70] sm:$0xff]
      %v354 = vld [vmem:[#allocation2 + $0x78] sm:$0xff]
      %v355 = vmax.f32 %v339, %v308
      %v356 = vmax.f32 %v340, %v310
      %v357 = vmax.f32 %v341, %v312
      %v358 = vmax.f32 %v342, %v314
      %v359 = vmax.f32 %v343, %v316
      %v360 = vmax.f32 %v344, %v318
      %v361 = vmax.f32 %v345, %v320
      %v362 = vmax.f32 %v346, %v322
      %v363 = vmax.f32 %v347, %v324
      %v364 = vmax.f32 %v348, %v326
      %v365 = vmax.f32 %v349, %v328
      %v366 = vmax.f32 %v350, %v330
      %v367 = vmax.f32 %v351, %v332
      %v368 = vmax.f32 %v352, %v334
      %v369 = vmax.f32 %v353, %v336
      %v370 = vmax.f32 %v354, %v338
      %vm371 = vcmp.eq.f32.partialorder %v339, %v355
      %vm372 = vcmp.eq.f32.partialorder %v340, %v356
      %vm373 = vcmp.eq.f32.partialorder %v341, %v357
      %vm374 = vcmp.eq.f32.partialorder %v342, %v358
      %vm375 = vcmp.eq.f32.partialorder %v343, %v359
      %vm376 = vcmp.eq.f32.partialorder %v344, %v360
      %vm377 = vcmp.eq.f32.partialorder %v345, %v361
      %vm378 = vcmp.eq.f32.partialorder %v346, %v362
      %vm379 = vcmp.eq.f32.partialorder %v347, %v363
      %vm380 = vcmp.eq.f32.partialorder %v348, %v364
      %vm381 = vcmp.eq.f32.partialorder %v349, %v365
      %vm382 = vcmp.eq.f32.partialorder %v350, %v366
      %vm383 = vcmp.eq.f32.partialorder %v351, %v367
      %vm384 = vcmp.eq.f32.partialorder %v352, %v368
      %vm385 = vcmp.eq.f32.partialorder %v353, %v369
      %vm386 = vcmp.eq.f32.partialorder %v354, %v370
      %v387 = vsub.f32 %v339, %v355
      %v388 = vsub.f32 %v340, %v356
      %v389 = vsub.f32 %v341, %v357
      %v390 = vsub.f32 %v342, %v358
      %v391 = vsub.f32 %v343, %v359
      %v392 = vsub.f32 %v344, %v360
      %v393 = vsub.f32 %v345, %v361
      %v394 = vsub.f32 %v346, %v362
      %v395 = vsub.f32 %v347, %v363
      %v396 = vsub.f32 %v348, %v364
      %v397 = vsub.f32 %v349, %v365
      %v398 = vsub.f32 %v350, %v366
      %v399 = vsub.f32 %v351, %v367
      %v400 = vsub.f32 %v352, %v368
      %v401 = vsub.f32 %v353, %v369
      %v402 = vsub.f32 %v354, %v370
      %v403 = vsel %vm371, 0.0, %v387
      %v404 = vsel %vm372, 0.0, %v388
      %v405 = vsel %vm373, 0.0, %v389
      %v406 = vsel %vm374, 0.0, %v390
      %v407 = vsel %vm375, 0.0, %v391
      %v408 = vsel %vm376, 0.0, %v392
      %v409 = vsel %vm377, 0.0, %v393
      %v410 = vsel %vm378, 0.0, %v394
      %v411 = vsel %vm379, 0.0, %v395
      %v412 = vsel %vm380, 0.0, %v396
      %v413 = vsel %vm381, 0.0, %v397
      %v414 = vsel %vm382, 0.0, %v398
      %v415 = vsel %vm383, 0.0, %v399
      %v416 = vsel %vm384, 0.0, %v400
      %v417 = vsel %vm385, 0.0, %v401
      %v418 = vsel %vm386, 0.0, %v402
      %420 = vset.pattern.permute.xlu0 0
      %421 = vperm.xlu0 %420, %v355
      %v422 = vpop.permute.xlu0 %421
      %425 = vset.pattern.permute.xlu0 0
      %426 = vperm.xlu0 %425, %v356
      %v427 = vpop.permute.xlu0 %426
      %430 = vset.pattern.permute.xlu0 0
      %431 = vperm.xlu0 %430, %v357
      %v432 = vpop.permute.xlu0 %431
      %435 = vset.pattern.permute.xlu0 0
      %436 = vperm.xlu0 %435, %v358
      %v437 = vpop.permute.xlu0 %436
      %440 = vset.pattern.permute.xlu0 0
      %441 = vperm.xlu0 %440, %v359
      %v442 = vpop.permute.xlu0 %441
      %445 = vset.pattern.permute.xlu0 0
      %446 = vperm.xlu0 %445, %v360
      %v447 = vpop.permute.xlu0 %446
      %450 = vset.pattern.permute.xlu0 0
      %451 = vperm.xlu0 %450, %v361
      %v452 = vpop.permute.xlu0 %451
      %455 = vset.pattern.permute.xlu0 0
      %456 = vperm.xlu0 %455, %v362
      %v457 = vpop.permute.xlu0 %456
      %460 = vset.pattern.permute.xlu0 0
      %461 = vperm.xlu0 %460, %v363
      %v462 = vpop.permute.xlu0 %461
      %465 = vset.pattern.permute.xlu0 0
      %466 = vperm.xlu0 %465, %v364
      %v467 = vpop.permute.xlu0 %466
      %470 = vset.pattern.permute.xlu0 0
      %471 = vperm.xlu0 %470, %v365
      %v472 = vpop.permute.xlu0 %471
      %475 = vset.pattern.permute.xlu0 0
      %476 = vperm.xlu0 %475, %v366
      %v477 = vpop.permute.xlu0 %476
      %480 = vset.pattern.permute.xlu0 0
      %481 = vperm.xlu0 %480, %v367
      %v482 = vpop.permute.xlu0 %481
      %485 = vset.pattern.permute.xlu0 0
      %486 = vperm.xlu0 %485, %v368
      %v487 = vpop.permute.xlu0 %486
      %490 = vset.pattern.permute.xlu0 0
      %491 = vperm.xlu0 %490, %v369
      %v492 = vpop.permute.xlu0 %491
      %495 = vset.pattern.permute.xlu0 0
      %496 = vperm.xlu0 %495, %v370
      %v497 = vpop.permute.xlu0 %496
      %v499 = vsub.f32 %v291, %v422
      %v500 = vsub.f32 %v292, %v427
      %v501 = vsub.f32 %v293, %v432
      %v502 = vsub.f32 %v294, %v437
      %v503 = vsub.f32 %v295, %v442
      %v504 = vsub.f32 %v296, %v447
      %v505 = vsub.f32 %v297, %v452
      %v506 = vsub.f32 %v298, %v457
      %v507 = vsub.f32 %v299, %v462
      %v508 = vsub.f32 %v300, %v467
      %v509 = vsub.f32 %v301, %v472
      %v510 = vsub.f32 %v302, %v477
      %v511 = vsub.f32 %v303, %v482
      %v512 = vsub.f32 %v304, %v487
      %v513 = vsub.f32 %v305, %v492
      %v514 = vsub.f32 %v306, %v497
      %v515 = vmul.f32 %v499, 1.442695
      %v516 = vpow.pop %v515
      %v517 = vmul.f32 %v500, 1.442695
      %v518 = vpow.pop %v517
      %v519 = vmul.f32 %v501, 1.442695
      %v520 = vpow.pop %v519
      %v521 = vmul.f32 %v502, 1.442695
      %v522 = vpow.pop %v521
      %v523 = vmul.f32 %v503, 1.442695
      %v524 = vpow.pop %v523
      %v525 = vmul.f32 %v504, 1.442695
      %v526 = vpow.pop %v525
      %v527 = vmul.f32 %v505, 1.442695
      %v528 = vpow.pop %v527
      %v529 = vmul.f32 %v506, 1.442695
      %v530 = vpow.pop %v529
      %v531 = vmul.f32 %v507, 1.442695
      %v532 = vpow.pop %v531
      %v533 = vmul.f32 %v508, 1.442695
      %v534 = vpow.pop %v533
      %v535 = vmul.f32 %v509, 1.442695
      %v536 = vpow.pop %v535
      %v537 = vmul.f32 %v510, 1.442695
      %v538 = vpow.pop %v537
      %v539 = vmul.f32 %v511, 1.442695
      %v540 = vpow.pop %v539
      %v541 = vmul.f32 %v512, 1.442695
      %v542 = vpow.pop %v541
      %v543 = vmul.f32 %v513, 1.442695
      %v544 = vpow.pop %v543
      %v545 = vmul.f32 %v514, 1.442695
      %v546 = vpow.pop %v545
      %547 = vadd.xlane.f32.xlu0 %v516
      %v548 = vpop.xlane.xlu0 %547
      %549 = vadd.xlane.f32.xlu0 %v518
      %v550 = vpop.xlane.xlu0 %549
      %551 = vadd.xlane.f32.xlu0 %v520
      %v552 = vpop.xlane.xlu0 %551
      %553 = vadd.xlane.f32.xlu0 %v522
      %v554 = vpop.xlane.xlu0 %553
      %555 = vadd.xlane.f32.xlu0 %v524
      %v556 = vpop.xlane.xlu0 %555
      %557 = vadd.xlane.f32.xlu0 %v526
      %v558 = vpop.xlane.xlu0 %557
      %559 = vadd.xlane.f32.xlu0 %v528
      %v560 = vpop.xlane.xlu0 %559
      %561 = vadd.xlane.f32.xlu0 %v530
      %v562 = vpop.xlane.xlu0 %561
      %563 = vadd.xlane.f32.xlu0 %v532
      %v564 = vpop.xlane.xlu0 %563
      %565 = vadd.xlane.f32.xlu0 %v534
      %v566 = vpop.xlane.xlu0 %565
      %567 = vadd.xlane.f32.xlu0 %v536
      %v568 = vpop.xlane.xlu0 %567
      %569 = vadd.xlane.f32.xlu0 %v538
      %v570 = vpop.xlane.xlu0 %569
      %571 = vadd.xlane.f32.xlu0 %v540
      %v572 = vpop.xlane.xlu0 %571
      %573 = vadd.xlane.f32.xlu0 %v542
      %v574 = vpop.xlane.xlu0 %573
      %575 = vadd.xlane.f32.xlu0 %v544
      %v576 = vpop.xlane.xlu0 %575
      %577 = vadd.xlane.f32.xlu0 %v546
      %v578 = vpop.xlane.xlu0 %577
      %v579 = vld [vmem:[#allocation3] sm:$0xff]
      %v580 = vld [vmem:[#allocation3 + $0x8] sm:$0xff]
      %v581 = vld [vmem:[#allocation3 + $0x10] sm:$0xff]
      %v582 = vld [vmem:[#allocation3 + $0x18] sm:$0xff]
      %v583 = vld [vmem:[#allocation3 + $0x20] sm:$0xff]
      %v584 = vld [vmem:[#allocation3 + $0x28] sm:$0xff]
      %v585 = vld [vmem:[#allocation3 + $0x30] sm:$0xff]
      %v586 = vld [vmem:[#allocation3 + $0x38] sm:$0xff]
      %v587 = vld [vmem:[#allocation3 + $0x40] sm:$0xff]
      %v588 = vld [vmem:[#allocation3 + $0x48] sm:$0xff]
      %v589 = vld [vmem:[#allocation3 + $0x50] sm:$0xff]
      %v590 = vld [vmem:[#allocation3 + $0x58] sm:$0xff]
      %v591 = vld [vmem:[#allocation3 + $0x60] sm:$0xff]
      %v592 = vld [vmem:[#allocation3 + $0x68] sm:$0xff]
      %v593 = vld [vmem:[#allocation3 + $0x70] sm:$0xff]
      %v594 = vld [vmem:[#allocation3 + $0x78] sm:$0xff]
      %v595 = vmul.f32 %v403, 1.442695
      %v596 = vpow.pop %v595
      %v597 = vmul.f32 %v404, 1.442695
      %v598 = vpow.pop %v597
      %v599 = vmul.f32 %v405, 1.442695
      %v600 = vpow.pop %v599
      %v601 = vmul.f32 %v406, 1.442695
      %v602 = vpow.pop %v601
      %v603 = vmul.f32 %v407, 1.442695
      %v604 = vpow.pop %v603
      %v605 = vmul.f32 %v408, 1.442695
      %v606 = vpow.pop %v605
      %v607 = vmul.f32 %v409, 1.442695
      %v608 = vpow.pop %v607
      %v609 = vmul.f32 %v410, 1.442695
      %v610 = vpow.pop %v609
      %v611 = vmul.f32 %v411, 1.442695
      %v612 = vpow.pop %v611
      %v613 = vmul.f32 %v412, 1.442695
      %v614 = vpow.pop %v613
      %v615 = vmul.f32 %v413, 1.442695
      %v616 = vpow.pop %v615
      %v617 = vmul.f32 %v414, 1.442695
      %v618 = vpow.pop %v617
      %v619 = vmul.f32 %v415, 1.442695
      %v620 = vpow.pop %v619
      %v621 = vmul.f32 %v416, 1.442695
      %v622 = vpow.pop %v621
      %v623 = vmul.f32 %v417, 1.442695
      %v624 = vpow.pop %v623
      %v625 = vmul.f32 %v418, 1.442695
      %v626 = vpow.pop %v625
      %v627 = vmul.f32 %v596, %v579
      %v628 = vmul.f32 %v598, %v580
      %v629 = vmul.f32 %v600, %v581
      %v630 = vmul.f32 %v602, %v582
      %v631 = vmul.f32 %v604, %v583
      %v632 = vmul.f32 %v606, %v584
      %v633 = vmul.f32 %v608, %v585
      %v634 = vmul.f32 %v610, %v586
      %v635 = vmul.f32 %v612, %v587
      %v636 = vmul.f32 %v614, %v588
      %v637 = vmul.f32 %v616, %v589
      %v638 = vmul.f32 %v618, %v590
      %v639 = vmul.f32 %v620, %v591
      %v640 = vmul.f32 %v622, %v592
      %v641 = vmul.f32 %v624, %v593
      %v642 = vmul.f32 %v626, %v594
      %v643 = vadd.f32 %v627, %v548
      %v644 = vadd.f32 %v628, %v550
      %v645 = vadd.f32 %v629, %v552
      %v646 = vadd.f32 %v630, %v554
      %v647 = vadd.f32 %v631, %v556
      %v648 = vadd.f32 %v632, %v558
      %v649 = vadd.f32 %v633, %v560
      %v650 = vadd.f32 %v634, %v562
      %v651 = vadd.f32 %v635, %v564
      %v652 = vadd.f32 %v636, %v566
      %v653 = vadd.f32 %v637, %v568
      %v654 = vadd.f32 %v638, %v570
      %v655 = vadd.f32 %v639, %v572
      %v656 = vadd.f32 %v640, %v574
      %v657 = vadd.f32 %v641, %v576
      %v658 = vadd.f32 %v642, %v578
      %v659 = vld [vmem:[%s235] sm:$0xff]
      %v660 = vld [vmem:[%s235 + $0x8] sm:$0xff]
      %v661 = vld [vmem:[%s235 + $0x10] sm:$0xff]
      %v662 = vld [vmem:[%s235 + $0x18] sm:$0xff]
      %v663 = vld [vmem:[%s235 + $0x20] sm:$0xff]
      %v664 = vld [vmem:[%s235 + $0x28] sm:$0xff]
      %v665 = vld [vmem:[%s235 + $0x30] sm:$0xff]
      %v666 = vld [vmem:[%s235 + $0x38] sm:$0xff]
      %v667 = vld [vmem:[%s235 + $0x40] sm:$0xff]
      %v668 = vld [vmem:[%s235 + $0x48] sm:$0xff]
      %v669 = vld [vmem:[%s235 + $0x50] sm:$0xff]
      %v670 = vld [vmem:[%s235 + $0x58] sm:$0xff]
      %v671 = vld [vmem:[%s235 + $0x60] sm:$0xff]
      %v672 = vld [vmem:[%s235 + $0x68] sm:$0xff]
      %v673 = vld [vmem:[%s235 + $0x70] sm:$0xff]
      %v674 = vld [vmem:[%s235 + $0x78] sm:$0xff]
      %676 = vset.pattern.permute.xlu0 0
      %677 = vperm.xlu0 %676, %v627
      %v678 = vpop.permute.xlu0 %677
      %681 = vset.pattern.permute.xlu0 0
      %682 = vperm.xlu0 %681, %v628
      %v683 = vpop.permute.xlu0 %682
      %686 = vset.pattern.permute.xlu0 0
      %687 = vperm.xlu0 %686, %v629
      %v688 = vpop.permute.xlu0 %687
      %691 = vset.pattern.permute.xlu0 0
      %692 = vperm.xlu0 %691, %v630
      %v693 = vpop.permute.xlu0 %692
      %696 = vset.pattern.permute.xlu0 0
      %697 = vperm.xlu0 %696, %v631
      %v698 = vpop.permute.xlu0 %697
      %701 = vset.pattern.permute.xlu0 0
      %702 = vperm.xlu0 %701, %v632
      %v703 = vpop.permute.xlu0 %702
      %706 = vset.pattern.permute.xlu0 0
      %707 = vperm.xlu0 %706, %v633
      %v708 = vpop.permute.xlu0 %707
      %711 = vset.pattern.permute.xlu0 0
      %712 = vperm.xlu0 %711, %v634
      %v713 = vpop.permute.xlu0 %712
      %716 = vset.pattern.permute.xlu0 0
      %717 = vperm.xlu0 %716, %v635
      %v718 = vpop.permute.xlu0 %717
      %721 = vset.pattern.permute.xlu0 0
      %722 = vperm.xlu0 %721, %v636
      %v723 = vpop.permute.xlu0 %722
      %726 = vset.pattern.permute.xlu0 0
      %727 = vperm.xlu0 %726, %v637
      %v728 = vpop.permute.xlu0 %727
      %731 = vset.pattern.permute.xlu0 0
      %732 = vperm.xlu0 %731, %v638
      %v733 = vpop.permute.xlu0 %732
      %736 = vset.pattern.permute.xlu0 0
      %737 = vperm.xlu0 %736, %v639
      %v738 = vpop.permute.xlu0 %737
      %741 = vset.pattern.permute.xlu0 0
      %742 = vperm.xlu0 %741, %v640
      %v743 = vpop.permute.xlu0 %742
      %746 = vset.pattern.permute.xlu0 0
      %747 = vperm.xlu0 %746, %v641
      %v748 = vpop.permute.xlu0 %747
      %751 = vset.pattern.permute.xlu0 0
      %752 = vperm.xlu0 %751, %v642
      %v753 = vpop.permute.xlu0 %752
      %v755 = vmul.f32 %v678, %v659
      %v756 = vmul.f32 %v683, %v660
      %v757 = vmul.f32 %v688, %v661
      %v758 = vmul.f32 %v693, %v662
      %v759 = vmul.f32 %v698, %v663
      %v760 = vmul.f32 %v703, %v664
      %v761 = vmul.f32 %v708, %v665
      %v762 = vmul.f32 %v713, %v666
      %v763 = vmul.f32 %v718, %v667
      %v764 = vmul.f32 %v723, %v668
      %v765 = vmul.f32 %v728, %v669
      %v766 = vmul.f32 %v733, %v670
      %v767 = vmul.f32 %v738, %v671
      %v768 = vmul.f32 %v743, %v672
      %v769 = vmul.f32 %v748, %v673
      %v770 = vmul.f32 %v753, %v674
      %v771 = vld [vmem:[%s225] sm:$0xff]
      %v772 = vld [vmem:[%s225 + $0x8] sm:$0xff]
      %v773 = vld [vmem:[%s225 + $0x10] sm:$0xff]
      %v774 = vld [vmem:[%s225 + $0x18] sm:$0xff]
      %v775 = vld [vmem:[%s225 + $0x20] sm:$0xff]
      %v776 = vld [vmem:[%s225 + $0x28] sm:$0xff]
      %v777 = vld [vmem:[%s225 + $0x30] sm:$0xff]
      %v778 = vld [vmem:[%s225 + $0x38] sm:$0xff]
      %v779 = vld [vmem:[%s225 + $0x40] sm:$0xff]
      %v780 = vld [vmem:[%s225 + $0x48] sm:$0xff]
      %v781 = vld [vmem:[%s225 + $0x50] sm:$0xff]
      %v782 = vld [vmem:[%s225 + $0x58] sm:$0xff]
      %v783 = vld [vmem:[%s225 + $0x60] sm:$0xff]
      %v784 = vld [vmem:[%s225 + $0x68] sm:$0xff]
      %v785 = vld [vmem:[%s225 + $0x70] sm:$0xff]
      %v786 = vld [vmem:[%s225 + $0x78] sm:$0xff]
      %787 = vmatpush.msra.mxu0 %v786
      %788 = vmatpush.msra.mxu0 %v785
      %789 = vmatpush.msra.mxu0 %v784
      %790 = vmatpush.msra.mxu0 %v783
      %791 = vmatpush.msra.mxu0 %v782
      %792 = vmatpush.msra.mxu0 %v781
      %793 = vmatpush.msra.mxu0 %v780
      %794 = vmatpush.msra.mxu0 %v779
      %795 = vmatpush.msra.mxu0 %v778
      %796 = vmatpush.msra.mxu0 %v777
      %797 = vmatpush.msra.mxu0 %v776
      %798 = vmatpush.msra.mxu0 %v775
      %799 = vmatpush.msra.mxu0 %v774
      %800 = vmatpush.msra.mxu0 %v773
      %801 = vmatpush.msra.mxu0 %v772
      %802 = vmatpush.msra.mxu0 %v771
      %803 = vmatmul.f32.gmra.mxu0 %v516
      %v804 = vpop.f32.mrf.mxu0
      %v805 = vadd.f32 %v755, %v804
      %806 = vmatmul.f32.gmra.mxu0 %v518
      %v807 = vpop.f32.mrf.mxu0
      %v808 = vadd.f32 %v756, %v807
      %809 = vmatmul.f32.gmra.mxu0 %v520
      %v810 = vpop.f32.mrf.mxu0
      %v811 = vadd.f32 %v757, %v810
      %812 = vmatmul.f32.gmra.mxu0 %v522
      %v813 = vpop.f32.mrf.mxu0
      %v814 = vadd.f32 %v758, %v813
      %815 = vmatmul.f32.gmra.mxu0 %v524
      %v816 = vpop.f32.mrf.mxu0
      %v817 = vadd.f32 %v759, %v816
      %818 = vmatmul.f32.gmra.mxu0 %v526
      %v819 = vpop.f32.mrf.mxu0
      %v820 = vadd.f32 %v760, %v819
      %821 = vmatmul.f32.gmra.mxu0 %v528
      %v822 = vpop.f32.mrf.mxu0
      %v823 = vadd.f32 %v761, %v822
      %824 = vmatmul.f32.gmra.mxu0 %v530
      %v825 = vpop.f32.mrf.mxu0
      %v826 = vadd.f32 %v762, %v825
      %827 = vmatmul.f32.gmra.mxu0 %v532
      %v828 = vpop.f32.mrf.mxu0
      %v829 = vadd.f32 %v763, %v828
      %830 = vmatmul.f32.gmra.mxu0 %v534
      %v831 = vpop.f32.mrf.mxu0
      %v832 = vadd.f32 %v764, %v831
      %833 = vmatmul.f32.gmra.mxu0 %v536
      %v834 = vpop.f32.mrf.mxu0
      %v835 = vadd.f32 %v765, %v834
      %836 = vmatmul.f32.gmra.mxu0 %v538
      %v837 = vpop.f32.mrf.mxu0
      %v838 = vadd.f32 %v766, %v837
      %839 = vmatmul.f32.gmra.mxu0 %v540
      %v840 = vpop.f32.mrf.mxu0
      %v841 = vadd.f32 %v767, %v840
      %842 = vmatmul.f32.gmra.mxu0 %v542
      %v843 = vpop.f32.mrf.mxu0
      %v844 = vadd.f32 %v768, %v843
      %845 = vmatmul.f32.gmra.mxu0 %v544
      %v846 = vpop.f32.mrf.mxu0
      %v847 = vadd.f32 %v769, %v846
      %848 = vmatmul.f32.gmra.mxu0 %v546
      %v849 = vpop.f32.mrf.mxu0
      %v850 = vadd.f32 %v770, %v849
      %851 = vdwg.mxu0
      %v852 = vrcp.pop %v643
      %v853 = vmul.f32 %v643, %v852
      %v854 = vsub.f32 1.0, %v853
      %v855 = vmul.f32 %v852, %v854
      %v856 = vadd.f32 %v852, %v855
      %vm857 = vweird.f32 %v643
      %vm858 = vweird.f32 %v852
      %vm859 = vmor %vm857, %vm858
      %v860 = vsel %vm859, %v852, %v856
      %v861 = vand.u32 2147483647, %v643
      %vm862 = vcmp.eq.f32.partialorder %v861, 8.507059e+37
      %v863 = vand.u32 %v643, 2147483648
      %v864 = vor.u32 1.1754944e-38, %v863
      %v865 = vsel %vm862, %v864, %v860
      %v866 = vmul.f32 1.0, %v865
      %v867 = vrcp.pop %v644
      %v868 = vmul.f32 %v644, %v867
      %v869 = vsub.f32 1.0, %v868
      %v870 = vmul.f32 %v867, %v869
      %v871 = vadd.f32 %v867, %v870
      %vm872 = vweird.f32 %v644
      %vm873 = vweird.f32 %v867
      %vm874 = vmor %vm872, %vm873
      %v875 = vsel %vm874, %v867, %v871
      %v876 = vand.u32 2147483647, %v644
      %vm877 = vcmp.eq.f32.partialorder %v876, 8.507059e+37
      %v878 = vand.u32 %v644, 2147483648
      %v879 = vor.u32 1.1754944e-38, %v878
      %v880 = vsel %vm877, %v879, %v875
      %v881 = vmul.f32 1.0, %v880
      %v882 = vrcp.pop %v645
      %v883 = vmul.f32 %v645, %v882
      %v884 = vsub.f32 1.0, %v883
      %v885 = vmul.f32 %v882, %v884
      %v886 = vadd.f32 %v882, %v885
      %vm887 = vweird.f32 %v645
      %vm888 = vweird.f32 %v882
      %vm889 = vmor %vm887, %vm888
      %v890 = vsel %vm889, %v882, %v886
      %v891 = vand.u32 2147483647, %v645
      %vm892 = vcmp.eq.f32.partialorder %v891, 8.507059e+37
      %v893 = vand.u32 %v645, 2147483648
      %v894 = vor.u32 1.1754944e-38, %v893
      %v895 = vsel %vm892, %v894, %v890
      %v896 = vmul.f32 1.0, %v895
      %v897 = vrcp.pop %v646
      %v898 = vmul.f32 %v646, %v897
      %v899 = vsub.f32 1.0, %v898
      %v900 = vmul.f32 %v897, %v899
      %v901 = vadd.f32 %v897, %v900
      %vm902 = vweird.f32 %v646
      %vm903 = vweird.f32 %v897
      %vm904 = vmor %vm902, %vm903
      %v905 = vsel %vm904, %v897, %v901
      %v906 = vand.u32 2147483647, %v646
      %vm907 = vcmp.eq.f32.partialorder %v906, 8.507059e+37
      %v908 = vand.u32 %v646, 2147483648
      %v909 = vor.u32 1.1754944e-38, %v908
      %v910 = vsel %vm907, %v909, %v905
      %v911 = vmul.f32 1.0, %v910
      %v912 = vrcp.pop %v647
      %v913 = vmul.f32 %v647, %v912
      %v914 = vsub.f32 1.0, %v913
      %v915 = vmul.f32 %v912, %v914
      %v916 = vadd.f32 %v912, %v915
      %vm917 = vweird.f32 %v647
      %vm918 = vweird.f32 %v912
      %vm919 = vmor %vm917, %vm918
      %v920 = vsel %vm919, %v912, %v916
      %v921 = vand.u32 2147483647, %v647
      %vm922 = vcmp.eq.f32.partialorder %v921, 8.507059e+37
      %v923 = vand.u32 %v647, 2147483648
      %v924 = vor.u32 1.1754944e-38, %v923
      %v925 = vsel %vm922, %v924, %v920
      %v926 = vmul.f32 1.0, %v925
      %v927 = vrcp.pop %v648
      %v928 = vmul.f32 %v648, %v927
      %v929 = vsub.f32 1.0, %v928
      %v930 = vmul.f32 %v927, %v929
      %v931 = vadd.f32 %v927, %v930
      %vm932 = vweird.f32 %v648
      %vm933 = vweird.f32 %v927
      %vm934 = vmor %vm932, %vm933
      %v935 = vsel %vm934, %v927, %v931
      %v936 = vand.u32 2147483647, %v648
      %vm937 = vcmp.eq.f32.partialorder %v936, 8.507059e+37
      %v938 = vand.u32 %v648, 2147483648
      %v939 = vor.u32 1.1754944e-38, %v938
      %v940 = vsel %vm937, %v939, %v935
      %v941 = vmul.f32 1.0, %v940
      %v942 = vrcp.pop %v649
      %v943 = vmul.f32 %v649, %v942
      %v944 = vsub.f32 1.0, %v943
      %v945 = vmul.f32 %v942, %v944
      %v946 = vadd.f32 %v942, %v945
      %vm947 = vweird.f32 %v649
      %vm948 = vweird.f32 %v942
      %vm949 = vmor %vm947, %vm948
      %v950 = vsel %vm949, %v942, %v946
      %v951 = vand.u32 2147483647, %v649
      %vm952 = vcmp.eq.f32.partialorder %v951, 8.507059e+37
      %v953 = vand.u32 %v649, 2147483648
      %v954 = vor.u32 1.1754944e-38, %v953
      %v955 = vsel %vm952, %v954, %v950
      %v956 = vmul.f32 1.0, %v955
      %v957 = vrcp.pop %v650
      %v958 = vmul.f32 %v650, %v957
      %v959 = vsub.f32 1.0, %v958
      %v960 = vmul.f32 %v957, %v959
      %v961 = vadd.f32 %v957, %v960
      %vm962 = vweird.f32 %v650
      %vm963 = vweird.f32 %v957
      %vm964 = vmor %vm962, %vm963
      %v965 = vsel %vm964, %v957, %v961
      %v966 = vand.u32 2147483647, %v650
      %vm967 = vcmp.eq.f32.partialorder %v966, 8.507059e+37
      %v968 = vand.u32 %v650, 2147483648
      %v969 = vor.u32 1.1754944e-38, %v968
      %v970 = vsel %vm967, %v969, %v965
      %v971 = vmul.f32 1.0, %v970
      %v972 = vrcp.pop %v651
      %v973 = vmul.f32 %v651, %v972
      %v974 = vsub.f32 1.0, %v973
      %v975 = vmul.f32 %v972, %v974
      %v976 = vadd.f32 %v972, %v975
      %vm977 = vweird.f32 %v651
      %vm978 = vweird.f32 %v972
      %vm979 = vmor %vm977, %vm978
      %v980 = vsel %vm979, %v972, %v976
      %v981 = vand.u32 2147483647, %v651
      %vm982 = vcmp.eq.f32.partialorder %v981, 8.507059e+37
      %v983 = vand.u32 %v651, 2147483648
      %v984 = vor.u32 1.1754944e-38, %v983
      %v985 = vsel %vm982, %v984, %v980
      %v986 = vmul.f32 1.0, %v985
      %v987 = vrcp.pop %v652
      %v988 = vmul.f32 %v652, %v987
      %v989 = vsub.f32 1.0, %v988
      %v990 = vmul.f32 %v987, %v989
      %v991 = vadd.f32 %v987, %v990
      %vm992 = vweird.f32 %v652
      %vm993 = vweird.f32 %v987
      %vm994 = vmor %vm992, %vm993
      %v995 = vsel %vm994, %v987, %v991
      %v996 = vand.u32 2147483647, %v652
      %vm997 = vcmp.eq.f32.partialorder %v996, 8.507059e+37
      %v998 = vand.u32 %v652, 2147483648
      %v999 = vor.u32 1.1754944e-38, %v998
      %v1000 = vsel %vm997, %v999, %v995
      %v1001 = vmul.f32 1.0, %v1000
      %v1002 = vrcp.pop %v653
      %v1003 = vmul.f32 %v653, %v1002
      %v1004 = vsub.f32 1.0, %v1003
      %v1005 = vmul.f32 %v1002, %v1004
      %v1006 = vadd.f32 %v1002, %v1005
      %vm1007 = vweird.f32 %v653
      %vm1008 = vweird.f32 %v1002
      %vm1009 = vmor %vm1007, %vm1008
      %v1010 = vsel %vm1009, %v1002, %v1006
      %v1011 = vand.u32 2147483647, %v653
      %vm1012 = vcmp.eq.f32.partialorder %v1011, 8.507059e+37
      %v1013 = vand.u32 %v653, 2147483648
      %v1014 = vor.u32 1.1754944e-38, %v1013
      %v1015 = vsel %vm1012, %v1014, %v1010
      %v1016 = vmul.f32 1.0, %v1015
      %v1017 = vrcp.pop %v654
      %v1018 = vmul.f32 %v654, %v1017
      %v1019 = vsub.f32 1.0, %v1018
      %v1020 = vmul.f32 %v1017, %v1019
      %v1021 = vadd.f32 %v1017, %v1020
      %vm1022 = vweird.f32 %v654
      %vm1023 = vweird.f32 %v1017
      %vm1024 = vmor %vm1022, %vm1023
      %v1025 = vsel %vm1024, %v1017, %v1021
      %v1026 = vand.u32 2147483647, %v654
      %vm1027 = vcmp.eq.f32.partialorder %v1026, 8.507059e+37
      %v1028 = vand.u32 %v654, 2147483648
      %v1029 = vor.u32 1.1754944e-38, %v1028
      %v1030 = vsel %vm1027, %v1029, %v1025
      %v1031 = vmul.f32 1.0, %v1030
      %v1032 = vrcp.pop %v655
      %v1033 = vmul.f32 %v655, %v1032
      %v1034 = vsub.f32 1.0, %v1033
      %v1035 = vmul.f32 %v1032, %v1034
      %v1036 = vadd.f32 %v1032, %v1035
      %vm1037 = vweird.f32 %v655
      %vm1038 = vweird.f32 %v1032
      %vm1039 = vmor %vm1037, %vm1038
      %v1040 = vsel %vm1039, %v1032, %v1036
      %v1041 = vand.u32 2147483647, %v655
      %vm1042 = vcmp.eq.f32.partialorder %v1041, 8.507059e+37
      %v1043 = vand.u32 %v655, 2147483648
      %v1044 = vor.u32 1.1754944e-38, %v1043
      %v1045 = vsel %vm1042, %v1044, %v1040
      %v1046 = vmul.f32 1.0, %v1045
      %v1047 = vrcp.pop %v656
      %v1048 = vmul.f32 %v656, %v1047
      %v1049 = vsub.f32 1.0, %v1048
      %v1050 = vmul.f32 %v1047, %v1049
      %v1051 = vadd.f32 %v1047, %v1050
      %vm1052 = vweird.f32 %v656
      %vm1053 = vweird.f32 %v1047
      %vm1054 = vmor %vm1052, %vm1053
      %v1055 = vsel %vm1054, %v1047, %v1051
      %v1056 = vand.u32 2147483647, %v656
      %vm1057 = vcmp.eq.f32.partialorder %v1056, 8.507059e+37
      %v1058 = vand.u32 %v656, 2147483648
      %v1059 = vor.u32 1.1754944e-38, %v1058
      %v1060 = vsel %vm1057, %v1059, %v1055
      %v1061 = vmul.f32 1.0, %v1060
      %v1062 = vrcp.pop %v657
      %v1063 = vmul.f32 %v657, %v1062
      %v1064 = vsub.f32 1.0, %v1063
      %v1065 = vmul.f32 %v1062, %v1064
      %v1066 = vadd.f32 %v1062, %v1065
      %vm1067 = vweird.f32 %v657
      %vm1068 = vweird.f32 %v1062
      %vm1069 = vmor %vm1067, %vm1068
      %v1070 = vsel %vm1069, %v1062, %v1066
      %v1071 = vand.u32 2147483647, %v657
      %vm1072 = vcmp.eq.f32.partialorder %v1071, 8.507059e+37
      %v1073 = vand.u32 %v657, 2147483648
      %v1074 = vor.u32 1.1754944e-38, %v1073
      %v1075 = vsel %vm1072, %v1074, %v1070
      %v1076 = vmul.f32 1.0, %v1075
      %v1077 = vrcp.pop %v658
      %v1078 = vmul.f32 %v658, %v1077
      %v1079 = vsub.f32 1.0, %v1078
      %v1080 = vmul.f32 %v1077, %v1079
      %v1081 = vadd.f32 %v1077, %v1080
      %vm1082 = vweird.f32 %v658
      %vm1083 = vweird.f32 %v1077
      %vm1084 = vmor %vm1082, %vm1083
      %v1085 = vsel %vm1084, %v1077, %v1081
      %v1086 = vand.u32 2147483647, %v658
      %vm1087 = vcmp.eq.f32.partialorder %v1086, 8.507059e+37
      %v1088 = vand.u32 %v658, 2147483648
      %v1089 = vor.u32 1.1754944e-38, %v1088
      %v1090 = vsel %vm1087, %v1089, %v1085
      %v1091 = vmul.f32 1.0, %v1090
      %1093 = vset.pattern.permute.xlu0 0
      %1094 = vperm.xlu0 %1093, %v866
      %v1095 = vpop.permute.xlu0 %1094
      %1098 = vset.pattern.permute.xlu0 0
      %1099 = vperm.xlu0 %1098, %v881
      %v1100 = vpop.permute.xlu0 %1099
      %1103 = vset.pattern.permute.xlu0 0
      %1104 = vperm.xlu0 %1103, %v896
      %v1105 = vpop.permute.xlu0 %1104
      %1108 = vset.pattern.permute.xlu0 0
      %1109 = vperm.xlu0 %1108, %v911
      %v1110 = vpop.permute.xlu0 %1109
      %1113 = vset.pattern.permute.xlu0 0
      %1114 = vperm.xlu0 %1113, %v926
      %v1115 = vpop.permute.xlu0 %1114
      %1118 = vset.pattern.permute.xlu0 0
      %1119 = vperm.xlu0 %1118, %v941
      %v1120 = vpop.permute.xlu0 %1119
      %1123 = vset.pattern.permute.xlu0 0
      %1124 = vperm.xlu0 %1123, %v956
      %v1125 = vpop.permute.xlu0 %1124
      %1128 = vset.pattern.permute.xlu0 0
      %1129 = vperm.xlu0 %1128, %v971
      %v1130 = vpop.permute.xlu0 %1129
      %1133 = vset.pattern.permute.xlu0 0
      %1134 = vperm.xlu0 %1133, %v986
      %v1135 = vpop.permute.xlu0 %1134
      %1138 = vset.pattern.permute.xlu0 0
      %1139 = vperm.xlu0 %1138, %v1001
      %v1140 = vpop.permute.xlu0 %1139
      %1143 = vset.pattern.permute.xlu0 0
      %1144 = vperm.xlu0 %1143, %v1016
      %v1145 = vpop.permute.xlu0 %1144
      %1148 = vset.pattern.permute.xlu0 0
      %1149 = vperm.xlu0 %1148, %v1031
      %v1150 = vpop.permute.xlu0 %1149
      %1153 = vset.pattern.permute.xlu0 0
      %1154 = vperm.xlu0 %1153, %v1046
      %v1155 = vpop.permute.xlu0 %1154
      %1158 = vset.pattern.permute.xlu0 0
      %1159 = vperm.xlu0 %1158, %v1061
      %v1160 = vpop.permute.xlu0 %1159
      %1163 = vset.pattern.permute.xlu0 0
      %1164 = vperm.xlu0 %1163, %v1076
      %v1165 = vpop.permute.xlu0 %1164
      %1168 = vset.pattern.permute.xlu0 0
      %1169 = vperm.xlu0 %1168, %v1091
      %v1170 = vpop.permute.xlu0 %1169
      %v1172 = vmul.f32 %v805, %v1095
      %v1173 = vmul.f32 %v808, %v1100
      %v1174 = vmul.f32 %v811, %v1105
      %v1175 = vmul.f32 %v814, %v1110
      %v1176 = vmul.f32 %v817, %v1115
      %v1177 = vmul.f32 %v820, %v1120
      %v1178 = vmul.f32 %v823, %v1125
      %v1179 = vmul.f32 %v826, %v1130
      %v1180 = vmul.f32 %v829, %v1135
      %v1181 = vmul.f32 %v832, %v1140
      %v1182 = vmul.f32 %v835, %v1145
      %v1183 = vmul.f32 %v838, %v1150
      %v1184 = vmul.f32 %v841, %v1155
      %v1185 = vmul.f32 %v844, %v1160
      %v1186 = vmul.f32 %v847, %v1165
      %v1187 = vmul.f32 %v850, %v1170
      %vm1188 = vcmask 523264
      %1189 = vst.msk [vmem:[%s235] sm:$0xff] %vm1188, %v1172
      %1190 = vst.msk [vmem:[%s235 + $0x8] sm:$0xff] %vm1188, %v1173
      %1191 = vst.msk [vmem:[%s235 + $0x10] sm:$0xff] %vm1188, %v1174
      %1192 = vst.msk [vmem:[%s235 + $0x18] sm:$0xff] %vm1188, %v1175
      %1193 = vst.msk [vmem:[%s235 + $0x20] sm:$0xff] %vm1188, %v1176
      %1194 = vst.msk [vmem:[%s235 + $0x28] sm:$0xff] %vm1188, %v1177
      %1195 = vst.msk [vmem:[%s235 + $0x30] sm:$0xff] %vm1188, %v1178
      %1196 = vst.msk [vmem:[%s235 + $0x38] sm:$0xff] %vm1188, %v1179
      %1197 = vst.msk [vmem:[%s235 + $0x40] sm:$0xff] %vm1188, %v1180
      %1198 = vst.msk [vmem:[%s235 + $0x48] sm:$0xff] %vm1188, %v1181
      %1199 = vst.msk [vmem:[%s235 + $0x50] sm:$0xff] %vm1188, %v1182
      %1200 = vst.msk [vmem:[%s235 + $0x58] sm:$0xff] %vm1188, %v1183
      %1201 = vst.msk [vmem:[%s235 + $0x60] sm:$0xff] %vm1188, %v1184
      %1202 = vst.msk [vmem:[%s235 + $0x68] sm:$0xff] %vm1188, %v1185
      %1203 = vst.msk [vmem:[%s235 + $0x70] sm:$0xff] %vm1188, %v1186
      %1204 = vst.msk [vmem:[%s235 + $0x78] sm:$0xff] %vm1188, %v1187
      %vm1205 = vcmask 7168
      %1206 = vst.msk [vmem:[#allocation2] sm:$0xff] %vm1205, %v355
      %1207 = vst.msk [vmem:[#allocation2 + $0x8] sm:$0xff] %vm1205, %v356
      %1208 = vst.msk [vmem:[#allocation2 + $0x10] sm:$0xff] %vm1205, %v357
      %1209 = vst.msk [vmem:[#allocation2 + $0x18] sm:$0xff] %vm1205, %v358
      %1210 = vst.msk [vmem:[#allocation2 + $0x20] sm:$0xff] %vm1205, %v359
      %1211 = vst.msk [vmem:[#allocation2 + $0x28] sm:$0xff] %vm1205, %v360
      %1212 = vst.msk [vmem:[#allocation2 + $0x30] sm:$0xff] %vm1205, %v361
      %1213 = vst.msk [vmem:[#allocation2 + $0x38] sm:$0xff] %vm1205, %v362
      %1214 = vst.msk [vmem:[#allocation2 + $0x40] sm:$0xff] %vm1205, %v363
      %1215 = vst.msk [vmem:[#allocation2 + $0x48] sm:$0xff] %vm1205, %v364
      %1216 = vst.msk [vmem:[#allocation2 + $0x50] sm:$0xff] %vm1205, %v365
      %1217 = vst.msk [vmem:[#allocation2 + $0x58] sm:$0xff] %vm1205, %v366
      %1218 = vst.msk [vmem:[#allocation2 + $0x60] sm:$0xff] %vm1205, %v367
      %1219 = vst.msk [vmem:[#allocation2 + $0x68] sm:$0xff] %vm1205, %v368
      %1220 = vst.msk [vmem:[#allocation2 + $0x70] sm:$0xff] %vm1205, %v369
      %1221 = vst.msk [vmem:[#allocation2 + $0x78] sm:$0xff] %vm1205, %v370
      %1222 = vst.msk [vmem:[#allocation3] sm:$0xff] %vm1205, %v643
      %1223 = vst.msk [vmem:[#allocation3 + $0x8] sm:$0xff] %vm1205, %v644
      %1224 = vst.msk [vmem:[#allocation3 + $0x10] sm:$0xff] %vm1205, %v645
      %1225 = vst.msk [vmem:[#allocation3 + $0x18] sm:$0xff] %vm1205, %v646
      %1226 = vst.msk [vmem:[#allocation3 + $0x20] sm:$0xff] %vm1205, %v647
      %1227 = vst.msk [vmem:[#allocation3 + $0x28] sm:$0xff] %vm1205, %v648
      %1228 = vst.msk [vmem:[#allocation3 + $0x30] sm:$0xff] %vm1205, %v649
      %1229 = vst.msk [vmem:[#allocation3 + $0x38] sm:$0xff] %vm1205, %v650
      %1230 = vst.msk [vmem:[#allocation3 + $0x40] sm:$0xff] %vm1205, %v651
      %1231 = vst.msk [vmem:[#allocation3 + $0x48] sm:$0xff] %vm1205, %v652
      %1232 = vst.msk [vmem:[#allocation3 + $0x50] sm:$0xff] %vm1205, %v653
      %1233 = vst.msk [vmem:[#allocation3 + $0x58] sm:$0xff] %vm1205, %v654
      %1234 = vst.msk [vmem:[#allocation3 + $0x60] sm:$0xff] %vm1205, %v655
      %1235 = vst.msk [vmem:[#allocation3 + $0x68] sm:$0xff] %vm1205, %v656
      %1236 = vst.msk [vmem:[#allocation3 + $0x70] sm:$0xff] %vm1205, %v657
      %1237 = vst.msk [vmem:[#allocation3 + $0x78] sm:$0xff] %vm1205, %v658
      %s1238 = smul.u32 16, %s19
      %p1239 = scmp.lt.s32.totalorder %s18, 1
      %s1240 = scalar_select %p1239, %s18, 1
      %p1241 = scmp.lt.s32.totalorder %s1238, 15
      %s1242 = scalar_select %p1241, %s1238, 15
      %s1243 = smul.addr %s1240, 16
      %s1244 = sadd.s32 %s1242, %s1243
      %s1245 = smul.addr %s1244, 8
      %s1246 = scalar_lea.vmem %s2, %s1245
      // Predicated region
      $region33: #{online-softmax.1} parent=27 // pred_check
        %p1247 = pneg %p110
      $region34: #{online-softmax.1} parent=27 // pred_check_branch
        %1249 = sbr.rel (%p1247) target = $region36
      $region35: #{online-softmax.1} parent=27 // pred_region
        %s1250 = smul.u32 16, %s19
      $region36: #{online-softmax.1} parent=27 // pred_fallthru
        _
    $region28: #{online-softmax.1} parent=5 // pred_fallthru
      _
    %p1251 = scmp.le.s32.totalorder 2, %s8
    // Predicated region
    $region37: #{online-softmax.1} parent=5 // pred_check
      %p1252 = pneg %p1251
    $region38: #{online-softmax.1} parent=5 // pred_check_branch
      %1254 = sbr.rel (%p1252) target = $region40
    $region39: #{online-softmax.1} parent=5 // pred_region
      %s1255 = ssub.s32 %s8, 2
      // Predicated region
      $region41: #{online-softmax.1} parent=39 // pred_check
        %p1256 = pneg %p116
      $region42: #{online-softmax.1} parent=39 // pred_check_branch
        %1258 = sbr.rel (%p1256) target = $region44
      $region43: #{online-softmax.1} parent=39 // pred_region
        %s1259 = smul.u32 16, %s22
        %p1260 = scmp.lt.s32.totalorder %s21, 1
        %s1261 = scalar_select %p1260, %s21, 1
        %p1262 = scmp.lt.s32.totalorder %s1259, 15
        %s1263 = scalar_select %p1262, %s1259, 15
        %s1264 = smul.addr %s1261, 16
        %s1265 = sadd.s32 %s1263, %s1264
        %s1266 = smul.addr %s1265, 8
        %s1267 = scalar_lea.vmem %s2, %s1266
      $region44: #{online-softmax.1} parent=39 // pred_fallthru
        _
    $region40: #{online-softmax.1} parent=5 // pred_fallthru
      _
  $region6: #{online-softmax.1} parent=0 // loop_footer
    %s12 = sadd.s32 1, %s8
  $region7: #{online-softmax.1} parent=0 // loop_footer_branch
    %7 = sbr.rel target = $region3
  $region8: #{online-softmax.1} parent=0 // loop_exit
    _

</llo_original>
